<compile_context>
chip_gen: v7x
topology: tpu7x:2x2x1
jax: 0.10.0
libtpu: 0.0.40
codegen_flags: <defaults>
</compile_context>

<pallas_src>
import jax
import jax.numpy as jnp
from jax import lax
from jax.experimental import pallas as pl
from jax.experimental.pallas import tpu as pltpu


def basic_block_kernel(x_ref, dw1_ref, pw1_ref, s1_ref, b1_ref,
                       dw2_ref, pw2_ref, s2_ref, b2_ref, o_ref):
    # x_ref: (1, H, W, C)  dw*: (3, 3, C) f32  pw*: (C, C) bf16  s*/b*: (1, C) f32
    H, W, C = x_ref.shape[1], x_ref.shape[2], x_ref.shape[3]
    x = x_ref[0].astype(jnp.float32)                      # (H, W, C), C on lanes

    # Column-validity masks for the W-axis (sublane) rotations.
    col = lax.broadcasted_iota(jnp.int32, (1, W, C), 1)
    not_first = col != 0                                  # w-1 tap invalid at w==0
    not_last = col != (W - 1)                             # w+1 tap invalid at w==W-1
    zrow = jnp.zeros((1, W, C), jnp.float32)

    def w_taps(t):
        # (t[:, w-1], t[:, w], t[:, w+1]) with zero boundaries.  pltpu.roll runs
        # on the XLU slot and keeps data in vregs (no padded-scratch round trip).
        t_m = jnp.where(not_first, pltpu.roll(t, shift=1, axis=1), 0.0)
        t_p = jnp.where(not_last, pltpu.roll(t, shift=W - 1, axis=1), 0.0)
        return t_m, t, t_p

    def depthwise3x3(t, w_ref):
        # Depthwise 3x3, padding=1, stride=1 (pure VPU work, f32).
        w = w_ref[...].astype(jnp.float32)                # hoisted cast, (3, 3, C)
        t_m, t_0, t_p = w_taps(t)
        # Per-kernel-row partial sums (W shifts already applied).
        rows = [t_m * w[kh, 0][None, None, :]
                + t_0 * w[kh, 1][None, None, :]
                + t_p * w[kh, 2][None, None, :]
                for kh in range(3)]
        # H shifts are leading-dim slices: no (8,128) tile-boundary relayouts.
        out = rows[1]
        out = out + jnp.concatenate([zrow, rows[0][:H - 1]], axis=0)   # tap h-1
        out = out + jnp.concatenate([rows[2][1:], zrow], axis=0)       # tap h+1
        return out

    def pointwise(t, pw_ref):
        # 1x1 conv == (H*W, C) @ (C, C) on the MXU; bf16 operands, f32 accumulate.
        a = t.reshape(H * W, C).astype(jnp.bfloat16)
        y = jnp.dot(a, pw_ref[...], preferred_element_type=jnp.float32)
        return y.reshape(H, W, C)

    s1 = s1_ref[...].astype(jnp.float32)
    b1 = b1_ref[...].astype(jnp.float32)
    s2 = s2_ref[...].astype(jnp.float32)
    b2 = b2_ref[...].astype(jnp.float32)

    out = depthwise3x3(x, dw1_ref)
    out = pointwise(out, pw1_ref)
    out = jnp.maximum(out * s1 + b1, 0.0)                 # BN1 (folded) + ReLU
    out = depthwise3x3(out, dw2_ref)
    out = pointwise(out, pw2_ref)
    out = out * s2 + b2                                   # BN2 (folded)
    out = jnp.maximum(out + x, 0.0)                       # residual + ReLU
    o_ref[0] = out.astype(o_ref.dtype)                    # lane-dense, unmasked vst


def basic_block_nhwc(x, dw1, pw1, s1, b1, dw2, pw2, s2, b2):
    """NHWC entry point; C must already be a multiple of 128 (lane-dense)."""
    N, H, W, C = x.shape
    img_spec = pl.BlockSpec((1, H, W, C), lambda n: (n, 0, 0, 0))
    dw_spec = pl.BlockSpec((3, 3, C), lambda n: (0, 0, 0))
    pw_spec = pl.BlockSpec((C, C), lambda n: (0, 0))
    vec_spec = pl.BlockSpec((1, C), lambda n: (0, 0))
    # TODO(synk): for large spatial extents (e.g. 224x224 ResNet stages) add an
    # H-strip grid axis with a 2-row halo so blocks stay inside v7x's 64 MiB VMEM.
    return pl.pallas_call(
        basic_block_kernel,
        out_shape=jax.ShapeDtypeStruct((N, H, W, C), x.dtype),
        grid=(N,),
        in_specs=[img_spec, dw_spec, pw_spec, vec_spec, vec_spec,
                  dw_spec, pw_spec, vec_spec, vec_spec],
        out_specs=img_spec,
        compiler_params=pltpu.CompilerParams(
            dimension_semantics=("parallel",)),
    )(x, dw1, pw1, s1, b1, dw2, pw2, s2, b2)


def basic_block_pallas(x_nchw, dw1, pw1, s1, b1, dw2, pw2, s2, b2):
    """NCHW wrapper matching the PyTorch module.

    Pads channels with zeros up to a multiple of 128 so the kernel's lane axis
    is dense; padded channels stay exactly zero through the whole block and are
    sliced off at the end.
    """
    # TODO(synk): in a full NHWC model keep activations NHWC end-to-end so these
    # transposes/pads fuse with neighbours instead of costing extra HBM traffic.
    x = jnp.transpose(x_nchw, (0, 2, 3, 1))               # NCHW -> NHWC
    C = x.shape[-1]
    cp = ((C + 127) // 128) * 128
    p = cp - C
    if p:
        x = jnp.pad(x, ((0, 0), (0, 0), (0, 0), (0, p)))
        dw1 = jnp.pad(dw1, ((0, 0), (0, 0), (0, p)))
        dw2 = jnp.pad(dw2, ((0, 0), (0, 0), (0, p)))
        pw1 = jnp.pad(pw1, ((0, p), (0, p)))
        pw2 = jnp.pad(pw2, ((0, p), (0, p)))
        s1 = jnp.pad(s1, ((0, 0), (0, p)))
        b1 = jnp.pad(b1, ((0, 0), (0, p)))
        s2 = jnp.pad(s2, ((0, 0), (0, p)))
        b2 = jnp.pad(b2, ((0, 0), (0, p)))
    out = basic_block_nhwc(x, dw1, pw1.astype(jnp.bfloat16), s1, b1,
                           dw2, pw2.astype(jnp.bfloat16), s2, b2)
    out = out[..., :C]
    return jnp.transpose(out, (0, 3, 1, 2))               # NHWC -> NCHW


def ref_forward(x_nchw, dw1, pw1, s1, b1, dw2, pw2, s2, b2):
    """Pure-JAX reference (XLA ops), NHWC internally.

    The pointwise 1x1 uses the same bf16-operand / f32-accumulate precision as
    the kernel so the comparison tolerance stays tight.
    """
    x = jnp.transpose(x_nchw, (0, 2, 3, 1))
    C = x.shape[-1]
    dn = lax.conv_dimension_numbers(x.shape, (3, 3, 1, C), ('NHWC', 'HWIO', 'NHWC'))

    def sep_conv(inp, dw, pw):
        k_dw = dw.reshape(3, 3, 1, C)                     # HWIO, groups=C
        y = lax.conv_general_dilated(inp, k_dw, (1, 1), ((1, 1), (1, 1)),
                                     dimension_numbers=dn, feature_group_count=C,
                                     precision=lax.Precision.HIGHEST)
        return jnp.einsum('nhwc,cd->nhwd', y.astype(jnp.bfloat16),
                          pw.astype(jnp.bfloat16),
                          preferred_element_type=jnp.float32)

    out = sep_conv(x, dw1, pw1)
    out = jnp.maximum(out * s1.reshape(1, 1, 1, C) + b1.reshape(1, 1, 1, C), 0.0)
    out = sep_conv(out, dw2, pw2)
    out = out * s2.reshape(1, 1, 1, C) + b2.reshape(1, 1, 1, C)
    out = jnp.maximum(out + x, 0.0)
    return jnp.transpose(out, (0, 3, 1, 2))


def make_params(key, C):
    """Deterministic init matching the PyTorch module's shapes.

    PyTorch shapes: depthwise (C,1,3,3), pointwise (C,C,1,1), BN params (C,).
    Kernel layout: dw -> (3,3,C), pw -> (Cin,Cout), BN folded (eval mode) into
    per-channel scale/bias of shape (1,C).
    """
    ks = jax.random.split(key, 10)
    eps = 1e-5

    def fold_bn(gamma, beta, mean, var):
        scale = gamma / jnp.sqrt(var + eps)
        bias = beta - mean * scale
        return scale.reshape(1, C), bias.reshape(1, C)

    dw1_t = jax.random.normal(ks[0], (C, 1, 3, 3), jnp.float32) * 0.2
    pw1_t = jax.random.normal(ks[1], (C, C, 1, 1), jnp.float32) * 0.2
    dw2_t = jax.random.normal(ks[2], (C, 1, 3, 3), jnp.float32) * 0.2
    pw2_t = jax.random.normal(ks[3], (C, C, 1, 1), jnp.float32) * 0.2

    g1 = 1.0 + 0.1 * jax.random.normal(ks[4], (C,), jnp.float32)
    be1 = 0.1 * jax.random.normal(ks[5], (C,), jnp.float32)
    m1 = 0.1 * jax.random.normal(ks[6], (C,), jnp.float32)
    v1 = jnp.abs(jax.random.normal(ks[7], (C,), jnp.float32)) + 0.5
    g2 = 1.0 + 0.1 * jax.random.normal(ks[8], (C,), jnp.float32)
    be2 = 0.1 * jax.random.normal(ks[9], (C,), jnp.float32)
    m2 = jnp.zeros((C,), jnp.float32)
    v2 = jnp.ones((C,), jnp.float32)

    dw1 = dw1_t[:, 0].transpose(1, 2, 0)                  # (3, 3, C)
    dw2 = dw2_t[:, 0].transpose(1, 2, 0)
    pw1 = pw1_t[:, :, 0, 0].T                             # (Cin, Cout)
    pw2 = pw2_t[:, :, 0, 0].T
    s1, b1 = fold_bn(g1, be1, m1, v1)
    s2, b2 = fold_bn(g2, be2, m2, v2)
    return dw1, pw1, s1, b1, dw2, pw2, s2, b2


if __name__ == "__main__":
    key = jax.random.PRNGKey(0)
    kx, kp = jax.random.split(key)

    N, C, H, W = 2, 4, 16, 16                 # inplanes == planes, stride=1
    x = jax.random.normal(kx, (N, C, H, W), jnp.float32)   # NCHW like PyTorch
    params = make_params(kp, C)

    fwd = jax.jit(basic_block_pallas)
    out = jax.block_until_ready(fwd(x, *params))
    ref = jax.block_until_ready(ref_forward(x, *params))

    assert out.shape == (N, C, H, W)
    err = float(jnp.max(jnp.abs(out - ref)))
    assert jnp.allclose(out, ref, rtol=2e-2, atol=2e-2), f"max abs err {err}"

    print("KERNEL_OK")
</pallas_src>

<mosaic_0001>
module attributes {stable_mosaic.version = 11 : i64} {
  func.func @basic_block_kernel(%arg0: i32, %arg1: memref<1x16x16x128xf32, #tpu.memory_space<vmem>>, %arg2: memref<3x3x128xf32, #tpu.memory_space<vmem>>, %arg3: memref<128x128xbf16, #tpu.memory_space<vmem>>, %arg4: memref<1x128xf32, #tpu.memory_space<vmem>>, %arg5: memref<1x128xf32, #tpu.memory_space<vmem>>, %arg6: memref<3x3x128xf32, #tpu.memory_space<vmem>>, %arg7: memref<128x128xbf16, #tpu.memory_space<vmem>>, %arg8: memref<1x128xf32, #tpu.memory_space<vmem>>, %arg9: memref<1x128xf32, #tpu.memory_space<vmem>>, %arg10: memref<1x16x16x128xf32, #tpu.memory_space<vmem>>) attributes {dimension_semantics = [#tpu.dimension_semantics<parallel>], iteration_bounds = array<i64: 2>, scalar_prefetch = 0 : i64, scratch_operands = 0 : i64, tpu.core_type = #tpu.core_type<tc>, window_params = [{transform_indices = @transform_0, window_bounds = array<i64: 1, 16, 16, 128>}, {pipeline_mode = #tpu.pipeline_mode<synchronous>, transform_indices = @transform_1, window_bounds = array<i64: 3, 3, 128>}, {pipeline_mode = #tpu.pipeline_mode<synchronous>, transform_indices = @transform_2, window_bounds = array<i64: 128, 128>}, {pipeline_mode = #tpu.pipeline_mode<synchronous>, transform_indices = @transform_3, window_bounds = array<i64: 1, 128>}, {pipeline_mode = #tpu.pipeline_mode<synchronous>, transform_indices = @transform_4, window_bounds = array<i64: 1, 128>}, {pipeline_mode = #tpu.pipeline_mode<synchronous>, transform_indices = @transform_5, window_bounds = array<i64: 3, 3, 128>}, {pipeline_mode = #tpu.pipeline_mode<synchronous>, transform_indices = @transform_6, window_bounds = array<i64: 128, 128>}, {pipeline_mode = #tpu.pipeline_mode<synchronous>, transform_indices = @transform_7, window_bounds = array<i64: 1, 128>}, {pipeline_mode = #tpu.pipeline_mode<synchronous>, transform_indices = @transform_8, window_bounds = array<i64: 1, 128>}, {transform_indices = @transform_9, window_bounds = array<i64: 1, 16, 16, 128>}]} {
    %c0 = arith.constant 0 : index
    %c0_0 = arith.constant 0 : index
    %c0_1 = arith.constant 0 : index
    %c0_2 = arith.constant 0 : index
    %0 = vector.load %arg1[%c0, %c0_0, %c0_1, %c0_2] : memref<1x16x16x128xf32, #tpu.memory_space<vmem>>, vector<1x16x16x128xf32>
    %1 = vector.shape_cast %0 : vector<1x16x16x128xf32> to vector<16x16x128xf32>
    %2 = tpu.iota {dimensions = array<i32: 1>} : vector<1x16x128xi32>
    %c0_i32 = arith.constant 0 : i32
    %3 = vector.broadcast %c0_i32 : i32 to vector<1x16x128xi32>
    %4 = arith.cmpi ne, %2, %3 : vector<1x16x128xi32>
    %c15_i32 = arith.constant 15 : i32
    %5 = vector.broadcast %c15_i32 : i32 to vector<1x16x128xi32>
    %6 = arith.cmpi ne, %2, %5 : vector<1x16x128xi32>
    %cst = arith.constant 0.000000e+00 : f32
    %7 = vector.broadcast %cst : f32 to vector<1x16x128xf32>
    %c0_3 = arith.constant 0 : index
    %c0_4 = arith.constant 0 : index
    %8 = vector.load %arg4[%c0_3, %c0_4] : memref<1x128xf32, #tpu.memory_space<vmem>>, vector<1x128xf32>
    %c0_5 = arith.constant 0 : index
    %c0_6 = arith.constant 0 : index
    %9 = vector.load %arg5[%c0_5, %c0_6] : memref<1x128xf32, #tpu.memory_space<vmem>>, vector<1x128xf32>
    %c0_7 = arith.constant 0 : index
    %c0_8 = arith.constant 0 : index
    %10 = vector.load %arg8[%c0_7, %c0_8] : memref<1x128xf32, #tpu.memory_space<vmem>>, vector<1x128xf32>
    %c0_9 = arith.constant 0 : index
    %c0_10 = arith.constant 0 : index
    %11 = vector.load %arg9[%c0_9, %c0_10] : memref<1x128xf32, #tpu.memory_space<vmem>>, vector<1x128xf32>
    %c0_11 = arith.constant 0 : index
    %c0_12 = arith.constant 0 : index
    %c0_13 = arith.constant 0 : index
    %12 = vector.load %arg2[%c0_11, %c0_12, %c0_13] : memref<3x3x128xf32, #tpu.memory_space<vmem>>, vector<3x3x128xf32>
    %c1_i32 = arith.constant 1 : i32
    %13 = tpu.dynamic_rotate %1 by %c1_i32 dim 1 : vector<16x16x128xf32>, i32 -> vector<16x16x128xf32>
    %cst_14 = arith.constant 0.000000e+00 : f32
    %14 = vector.shape_cast %4 : vector<1x16x128xi1> to vector<1x16x128xi1>
    %15 = vector.broadcast %14 : vector<1x16x128xi1> to vector<16x16x128xi1>
    %16 = vector.broadcast %cst_14 : f32 to vector<16x16x128xf32>
    %17 = arith.select %15, %13, %16 : vector<16x16x128xi1>, vector<16x16x128xf32>
    %c15_i32_15 = arith.constant 15 : i32
    %18 = tpu.dynamic_rotate %1 by %c15_i32_15 dim 1 : vector<16x16x128xf32>, i32 -> vector<16x16x128xf32>
    %cst_16 = arith.constant 0.000000e+00 : f32
    %19 = vector.shape_cast %6 : vector<1x16x128xi1> to vector<1x16x128xi1>
    %20 = vector.broadcast %19 : vector<1x16x128xi1> to vector<16x16x128xi1>
    %21 = vector.broadcast %cst_16 : f32 to vector<16x16x128xf32>
    %22 = arith.select %20, %18, %21 : vector<16x16x128xi1>, vector<16x16x128xf32>
    %23 = vector.extract_strided_slice %12 {offsets = [0, 0, 0], sizes = [1, 1, 128], strides = [1, 1, 1]} : vector<3x3x128xf32> to vector<1x1x128xf32>
    %24 = vector.shape_cast %23 : vector<1x1x128xf32> to vector<128xf32>
    %25 = vector.shape_cast %24 : vector<128xf32> to vector<1x1x128xf32>
    %26 = vector.broadcast %25 : vector<1x1x128xf32> to vector<16x16x128xf32>
    %27 = arith.mulf %17, %26 : vector<16x16x128xf32>
    %28 = vector.extract_strided_slice %12 {offsets = [0, 1, 0], sizes = [1, 1, 128], strides = [1, 1, 1]} : vector<3x3x128xf32> to vector<1x1x128xf32>
    %29 = vector.shape_cast %28 : vector<1x1x128xf32> to vector<128xf32>
    %30 = vector.shape_cast %29 : vector<128xf32> to vector<1x1x128xf32>
    %31 = vector.broadcast %30 : vector<1x1x128xf32> to vector<16x16x128xf32>
    %32 = arith.mulf %1, %31 : vector<16x16x128xf32>
    %33 = arith.addf %27, %32 : vector<16x16x128xf32>
    %34 = vector.extract_strided_slice %12 {offsets = [0, 2, 0], sizes = [1, 1, 128], strides = [1, 1, 1]} : vector<3x3x128xf32> to vector<1x1x128xf32>
    %35 = vector.shape_cast %34 : vector<1x1x128xf32> to vector<128xf32>
    %36 = vector.shape_cast %35 : vector<128xf32> to vector<1x1x128xf32>
    %37 = vector.broadcast %36 : vector<1x1x128xf32> to vector<16x16x128xf32>
    %38 = arith.mulf %22, %37 : vector<16x16x128xf32>
    %39 = arith.addf %33, %38 : vector<16x16x128xf32>
    %40 = vector.extract_strided_slice %12 {offsets = [1, 0, 0], sizes = [1, 1, 128], strides = [1, 1, 1]} : vector<3x3x128xf32> to vector<1x1x128xf32>
    %41 = vector.shape_cast %40 : vector<1x1x128xf32> to vector<128xf32>
    %42 = vector.shape_cast %41 : vector<128xf32> to vector<1x1x128xf32>
    %43 = vector.broadcast %42 : vector<1x1x128xf32> to vector<16x16x128xf32>
    %44 = arith.mulf %17, %43 : vector<16x16x128xf32>
    %45 = vector.extract_strided_slice %12 {offsets = [1, 1, 0], sizes = [1, 1, 128], strides = [1, 1, 1]} : vector<3x3x128xf32> to vector<1x1x128xf32>
    %46 = vector.shape_cast %45 : vector<1x1x128xf32> to vector<128xf32>
    %47 = vector.shape_cast %46 : vector<128xf32> to vector<1x1x128xf32>
    %48 = vector.broadcast %47 : vector<1x1x128xf32> to vector<16x16x128xf32>
    %49 = arith.mulf %1, %48 : vector<16x16x128xf32>
    %50 = arith.addf %44, %49 : vector<16x16x128xf32>
    %51 = vector.extract_strided_slice %12 {offsets = [1, 2, 0], sizes = [1, 1, 128], strides = [1, 1, 1]} : vector<3x3x128xf32> to vector<1x1x128xf32>
    %52 = vector.shape_cast %51 : vector<1x1x128xf32> to vector<128xf32>
    %53 = vector.shape_cast %52 : vector<128xf32> to vector<1x1x128xf32>
    %54 = vector.broadcast %53 : vector<1x1x128xf32> to vector<16x16x128xf32>
    %55 = arith.mulf %22, %54 : vector<16x16x128xf32>
    %56 = arith.addf %50, %55 : vector<16x16x128xf32>
    %57 = vector.extract_strided_slice %12 {offsets = [2, 0, 0], sizes = [1, 1, 128], strides = [1, 1, 1]} : vector<3x3x128xf32> to vector<1x1x128xf32>
    %58 = vector.shape_cast %57 : vector<1x1x128xf32> to vector<128xf32>
    %59 = vector.shape_cast %58 : vector<128xf32> to vector<1x1x128xf32>
    %60 = vector.broadcast %59 : vector<1x1x128xf32> to vector<16x16x128xf32>
    %61 = arith.mulf %17, %60 : vector<16x16x128xf32>
    %62 = vector.extract_strided_slice %12 {offsets = [2, 1, 0], sizes = [1, 1, 128], strides = [1, 1, 1]} : vector<3x3x128xf32> to vector<1x1x128xf32>
    %63 = vector.shape_cast %62 : vector<1x1x128xf32> to vector<128xf32>
    %64 = vector.shape_cast %63 : vector<128xf32> to vector<1x1x128xf32>
    %65 = vector.broadcast %64 : vector<1x1x128xf32> to vector<16x16x128xf32>
    %66 = arith.mulf %1, %65 : vector<16x16x128xf32>
    %67 = arith.addf %61, %66 : vector<16x16x128xf32>
    %68 = vector.extract_strided_slice %12 {offsets = [2, 2, 0], sizes = [1, 1, 128], strides = [1, 1, 1]} : vector<3x3x128xf32> to vector<1x1x128xf32>
    %69 = vector.shape_cast %68 : vector<1x1x128xf32> to vector<128xf32>
    %70 = vector.shape_cast %69 : vector<128xf32> to vector<1x1x128xf32>
    %71 = vector.broadcast %70 : vector<1x1x128xf32> to vector<16x16x128xf32>
    %72 = arith.mulf %22, %71 : vector<16x16x128xf32>
    %73 = arith.addf %67, %72 : vector<16x16x128xf32>
    %74 = vector.extract_strided_slice %39 {offsets = [0, 0, 0], sizes = [15, 16, 128], strides = [1, 1, 1]} : vector<16x16x128xf32> to vector<15x16x128xf32>
    %75 = tpu.concatenate %7, %74 in 0 : vector<1x16x128xf32>, vector<15x16x128xf32> -> vector<16x16x128xf32>
    %76 = arith.addf %56, %75 : vector<16x16x128xf32>
    %77 = vector.extract_strided_slice %73 {offsets = [1, 0, 0], sizes = [15, 16, 128], strides = [1, 1, 1]} : vector<16x16x128xf32> to vector<15x16x128xf32>
    %78 = tpu.concatenate %77, %7 in 0 : vector<15x16x128xf32>, vector<1x16x128xf32> -> vector<16x16x128xf32>
    %79 = arith.addf %76, %78 : vector<16x16x128xf32>
    %80 = vector.shape_cast %79 : vector<16x16x128xf32> to vector<256x128xf32>
    %81 = arith.truncf %80 : vector<256x128xf32> to vector<256x128xbf16>
    %c0_17 = arith.constant 0 : index
    %c0_18 = arith.constant 0 : index
    %82 = vector.load %arg3[%c0_17, %c0_18] : memref<128x128xbf16, #tpu.memory_space<vmem>>, vector<128x128xbf16>
    %cst_19 = arith.constant dense<0.000000e+00> : vector<256x128xf32>
    %83 = tpu.matmul %81, %82, %cst_19 {dimension_numbers = #tpu.dot_dimension_numbers<[1], [0], [0], [1], [0, 0, 1, 1], [], []>} : vector<256x128xbf16>, vector<128x128xbf16>, vector<256x128xf32> -> vector<256x128xf32>
    %84 = vector.shape_cast %83 : vector<256x128xf32> to vector<16x16x128xf32>
    %85 = vector.shape_cast %8 : vector<1x128xf32> to vector<1x1x128xf32>
    %86 = vector.broadcast %85 : vector<1x1x128xf32> to vector<16x16x128xf32>
    %87 = arith.mulf %84, %86 : vector<16x16x128xf32>
    %88 = vector.shape_cast %9 : vector<1x128xf32> to vector<1x1x128xf32>
    %89 = vector.broadcast %88 : vector<1x1x128xf32> to vector<16x16x128xf32>
    %90 = arith.addf %87, %89 : vector<16x16x128xf32>
    %cst_20 = arith.constant 0.000000e+00 : f32
    %91 = vector.broadcast %cst_20 : f32 to vector<16x16x128xf32>
    %92 = arith.maximumf %90, %91 : vector<16x16x128xf32>
    %c0_21 = arith.constant 0 : index
    %c0_22 = arith.constant 0 : index
    %c0_23 = arith.constant 0 : index
    %93 = vector.load %arg6[%c0_21, %c0_22, %c0_23] : memref<3x3x128xf32, #tpu.memory_space<vmem>>, vector<3x3x128xf32>
    %c1_i32_24 = arith.constant 1 : i32
    %94 = tpu.dynamic_rotate %92 by %c1_i32_24 dim 1 : vector<16x16x128xf32>, i32 -> vector<16x16x128xf32>
    %cst_25 = arith.constant 0.000000e+00 : f32
    %95 = vector.shape_cast %4 : vector<1x16x128xi1> to vector<1x16x128xi1>
    %96 = vector.broadcast %95 : vector<1x16x128xi1> to vector<16x16x128xi1>
    %97 = vector.broadcast %cst_25 : f32 to vector<16x16x128xf32>
    %98 = arith.select %96, %94, %97 : vector<16x16x128xi1>, vector<16x16x128xf32>
    %c15_i32_26 = arith.constant 15 : i32
    %99 = tpu.dynamic_rotate %92 by %c15_i32_26 dim 1 : vector<16x16x128xf32>, i32 -> vector<16x16x128xf32>
    %cst_27 = arith.constant 0.000000e+00 : f32
    %100 = vector.shape_cast %6 : vector<1x16x128xi1> to vector<1x16x128xi1>
    %101 = vector.broadcast %100 : vector<1x16x128xi1> to vector<16x16x128xi1>
    %102 = vector.broadcast %cst_27 : f32 to vector<16x16x128xf32>
    %103 = arith.select %101, %99, %102 : vector<16x16x128xi1>, vector<16x16x128xf32>
    %104 = vector.extract_strided_slice %93 {offsets = [0, 0, 0], sizes = [1, 1, 128], strides = [1, 1, 1]} : vector<3x3x128xf32> to vector<1x1x128xf32>
    %105 = vector.shape_cast %104 : vector<1x1x128xf32> to vector<128xf32>
    %106 = vector.shape_cast %105 : vector<128xf32> to vector<1x1x128xf32>
    %107 = vector.broadcast %106 : vector<1x1x128xf32> to vector<16x16x128xf32>
    %108 = arith.mulf %98, %107 : vector<16x16x128xf32>
    %109 = vector.extract_strided_slice %93 {offsets = [0, 1, 0], sizes = [1, 1, 128], strides = [1, 1, 1]} : vector<3x3x128xf32> to vector<1x1x128xf32>
    %110 = vector.shape_cast %109 : vector<1x1x128xf32> to vector<128xf32>
    %111 = vector.shape_cast %110 : vector<128xf32> to vector<1x1x128xf32>
    %112 = vector.broadcast %111 : vector<1x1x128xf32> to vector<16x16x128xf32>
    %113 = arith.mulf %92, %112 : vector<16x16x128xf32>
    %114 = arith.addf %108, %113 : vector<16x16x128xf32>
    %115 = vector.extract_strided_slice %93 {offsets = [0, 2, 0], sizes = [1, 1, 128], strides = [1, 1, 1]} : vector<3x3x128xf32> to vector<1x1x128xf32>
    %116 = vector.shape_cast %115 : vector<1x1x128xf32> to vector<128xf32>
    %117 = vector.shape_cast %116 : vector<128xf32> to vector<1x1x128xf32>
    %118 = vector.broadcast %117 : vector<1x1x128xf32> to vector<16x16x128xf32>
    %119 = arith.mulf %103, %118 : vector<16x16x128xf32>
    %120 = arith.addf %114, %119 : vector<16x16x128xf32>
    %121 = vector.extract_strided_slice %93 {offsets = [1, 0, 0], sizes = [1, 1, 128], strides = [1, 1, 1]} : vector<3x3x128xf32> to vector<1x1x128xf32>
    %122 = vector.shape_cast %121 : vector<1x1x128xf32> to vector<128xf32>
    %123 = vector.shape_cast %122 : vector<128xf32> to vector<1x1x128xf32>
    %124 = vector.broadcast %123 : vector<1x1x128xf32> to vector<16x16x128xf32>
    %125 = arith.mulf %98, %124 : vector<16x16x128xf32>
    %126 = vector.extract_strided_slice %93 {offsets = [1, 1, 0], sizes = [1, 1, 128], strides = [1, 1, 1]} : vector<3x3x128xf32> to vector<1x1x128xf32>
    %127 = vector.shape_cast %126 : vector<1x1x128xf32> to vector<128xf32>
    %128 = vector.shape_cast %127 : vector<128xf32> to vector<1x1x128xf32>
    %129 = vector.broadcast %128 : vector<1x1x128xf32> to vector<16x16x128xf32>
    %130 = arith.mulf %92, %129 : vector<16x16x128xf32>
    %131 = arith.addf %125, %130 : vector<16x16x128xf32>
    %132 = vector.extract_strided_slice %93 {offsets = [1, 2, 0], sizes = [1, 1, 128], strides = [1, 1, 1]} : vector<3x3x128xf32> to vector<1x1x128xf32>
    %133 = vector.shape_cast %132 : vector<1x1x128xf32> to vector<128xf32>
    %134 = vector.shape_cast %133 : vector<128xf32> to vector<1x1x128xf32>
    %135 = vector.broadcast %134 : vector<1x1x128xf32> to vector<16x16x128xf32>
    %136 = arith.mulf %103, %135 : vector<16x16x128xf32>
    %137 = arith.addf %131, %136 : vector<16x16x128xf32>
    %138 = vector.extract_strided_slice %93 {offsets = [2, 0, 0], sizes = [1, 1, 128], strides = [1, 1, 1]} : vector<3x3x128xf32> to vector<1x1x128xf32>
    %139 = vector.shape_cast %138 : vector<1x1x128xf32> to vector<128xf32>
    %140 = vector.shape_cast %139 : vector<128xf32> to vector<1x1x128xf32>
    %141 = vector.broadcast %140 : vector<1x1x128xf32> to vector<16x16x128xf32>
    %142 = arith.mulf %98, %141 : vector<16x16x128xf32>
    %143 = vector.extract_strided_slice %93 {offsets = [2, 1, 0], sizes = [1, 1, 128], strides = [1, 1, 1]} : vector<3x3x128xf32> to vector<1x1x128xf32>
    %144 = vector.shape_cast %143 : vector<1x1x128xf32> to vector<128xf32>
    %145 = vector.shape_cast %144 : vector<128xf32> to vector<1x1x128xf32>
    %146 = vector.broadcast %145 : vector<1x1x128xf32> to vector<16x16x128xf32>
    %147 = arith.mulf %92, %146 : vector<16x16x128xf32>
    %148 = arith.addf %142, %147 : vector<16x16x128xf32>
    %149 = vector.extract_strided_slice %93 {offsets = [2, 2, 0], sizes = [1, 1, 128], strides = [1, 1, 1]} : vector<3x3x128xf32> to vector<1x1x128xf32>
    %150 = vector.shape_cast %149 : vector<1x1x128xf32> to vector<128xf32>
    %151 = vector.shape_cast %150 : vector<128xf32> to vector<1x1x128xf32>
    %152 = vector.broadcast %151 : vector<1x1x128xf32> to vector<16x16x128xf32>
    %153 = arith.mulf %103, %152 : vector<16x16x128xf32>
    %154 = arith.addf %148, %153 : vector<16x16x128xf32>
    %155 = vector.extract_strided_slice %120 {offsets = [0, 0, 0], sizes = [15, 16, 128], strides = [1, 1, 1]} : vector<16x16x128xf32> to vector<15x16x128xf32>
    %156 = tpu.concatenate %7, %155 in 0 : vector<1x16x128xf32>, vector<15x16x128xf32> -> vector<16x16x128xf32>
    %157 = arith.addf %137, %156 : vector<16x16x128xf32>
    %158 = vector.extract_strided_slice %154 {offsets = [1, 0, 0], sizes = [15, 16, 128], strides = [1, 1, 1]} : vector<16x16x128xf32> to vector<15x16x128xf32>
    %159 = tpu.concatenate %158, %7 in 0 : vector<15x16x128xf32>, vector<1x16x128xf32> -> vector<16x16x128xf32>
    %160 = arith.addf %157, %159 : vector<16x16x128xf32>
    %161 = vector.shape_cast %160 : vector<16x16x128xf32> to vector<256x128xf32>
    %162 = arith.truncf %161 : vector<256x128xf32> to vector<256x128xbf16>
    %c0_28 = arith.constant 0 : index
    %c0_29 = arith.constant 0 : index
    %163 = vector.load %arg7[%c0_28, %c0_29] : memref<128x128xbf16, #tpu.memory_space<vmem>>, vector<128x128xbf16>
    %cst_30 = arith.constant dense<0.000000e+00> : vector<256x128xf32>
    %164 = tpu.matmul %162, %163, %cst_30 {dimension_numbers = #tpu.dot_dimension_numbers<[1], [0], [0], [1], [0, 0, 1, 1], [], []>} : vector<256x128xbf16>, vector<128x128xbf16>, vector<256x128xf32> -> vector<256x128xf32>
    %165 = vector.shape_cast %164 : vector<256x128xf32> to vector<16x16x128xf32>
    %166 = vector.shape_cast %10 : vector<1x128xf32> to vector<1x1x128xf32>
    %167 = vector.broadcast %166 : vector<1x1x128xf32> to vector<16x16x128xf32>
    %168 = arith.mulf %165, %167 : vector<16x16x128xf32>
    %169 = vector.shape_cast %11 : vector<1x128xf32> to vector<1x1x128xf32>
    %170 = vector.broadcast %169 : vector<1x1x128xf32> to vector<16x16x128xf32>
    %171 = arith.addf %168, %170 : vector<16x16x128xf32>
    %172 = arith.addf %171, %1 : vector<16x16x128xf32>
    %cst_31 = arith.constant 0.000000e+00 : f32
    %173 = vector.broadcast %cst_31 : f32 to vector<16x16x128xf32>
    %174 = arith.maximumf %172, %173 : vector<16x16x128xf32>
    %c0_32 = arith.constant 0 : index
    %c0_33 = arith.constant 0 : index
    %c0_34 = arith.constant 0 : index
    %c0_35 = arith.constant 0 : index
    %175 = vector.load %arg10[%c0_32, %c0_33, %c0_34, %c0_35] : memref<1x16x16x128xf32, #tpu.memory_space<vmem>>, vector<1x16x16x128xf32>
    %176 = vector.shape_cast %175 : vector<1x16x16x128xf32> to vector<16x16x128xf32>
    %177 = vector.shape_cast %174 : vector<16x16x128xf32> to vector<1x16x16x128xf32>
    tpu.vector_store %arg10[%c0_32, %c0_33, %c0_34, %c0_35], %177 {strides = array<i32>} : memref<1x16x16x128xf32, #tpu.memory_space<vmem>>, vector<1x16x16x128xf32>,
    return
  }
  func.func @transform_0(%arg0: i32) -> (i32, i32, i32, i32) {
    %c0_i32 = arith.constant 0 : i32
    %c0_i32_0 = arith.constant 0 : i32
    %c0_i32_1 = arith.constant 0 : i32
    %c0_i32_2 = arith.constant 0 : i32
    return %arg0, %c0_i32, %c0_i32_0, %c0_i32_1 : i32, i32, i32, i32
  }
  func.func @transform_1(%arg0: i32) -> (i32, i32, i32) {
    %c0_i32 = arith.constant 0 : i32
    %c0_i32_0 = arith.constant 0 : i32
    %c0_i32_1 = arith.constant 0 : i32
    %c0_i32_2 = arith.constant 0 : i32
    return %c0_i32, %c0_i32_0, %c0_i32_1 : i32, i32, i32
  }
  func.func @transform_2(%arg0: i32) -> (i32, i32) {
    %c0_i32 = arith.constant 0 : i32
    %c0_i32_0 = arith.constant 0 : i32
    %c0_i32_1 = arith.constant 0 : i32
    return %c0_i32, %c0_i32_0 : i32, i32
  }
  func.func @transform_3(%arg0: i32) -> (i32, i32) {
    %c0_i32 = arith.constant 0 : i32
    %c0_i32_0 = arith.constant 0 : i32
    %c0_i32_1 = arith.constant 0 : i32
    return %c0_i32, %c0_i32_0 : i32, i32
  }
  func.func @transform_4(%arg0: i32) -> (i32, i32) {
    %c0_i32 = arith.constant 0 : i32
    %c0_i32_0 = arith.constant 0 : i32
    %c0_i32_1 = arith.constant 0 : i32
    return %c0_i32, %c0_i32_0 : i32, i32
  }
  func.func @transform_5(%arg0: i32) -> (i32, i32, i32) {
    %c0_i32 = arith.constant 0 : i32
    %c0_i32_0 = arith.constant 0 : i32
    %c0_i32_1 = arith.constant 0 : i32
    %c0_i32_2 = arith.constant 0 : i32
    return %c0_i32, %c0_i32_0, %c0_i32_1 : i32, i32, i32
  }
  func.func @transform_6(%arg0: i32) -> (i32, i32) {
    %c0_i32 = arith.constant 0 : i32
    %c0_i32_0 = arith.constant 0 : i32
    %c0_i32_1 = arith.constant 0 : i32
    return %c0_i32, %c0_i32_0 : i32, i32
  }
  func.func @transform_7(%arg0: i32) -> (i32, i32) {
    %c0_i32 = arith.constant 0 : i32
    %c0_i32_0 = arith.constant 0 : i32
    %c0_i32_1 = arith.constant 0 : i32
    return %c0_i32, %c0_i32_0 : i32, i32
  }
  func.func @transform_8(%arg0: i32) -> (i32, i32) {
    %c0_i32 = arith.constant 0 : i32
    %c0_i32_0 = arith.constant 0 : i32
    %c0_i32_1 = arith.constant 0 : i32
    return %c0_i32, %c0_i32_0 : i32, i32
  }
  func.func @transform_9(%arg0: i32) -> (i32, i32, i32, i32) {
    %c0_i32 = arith.constant 0 : i32
    %c0_i32_0 = arith.constant 0 : i32
    %c0_i32_1 = arith.constant 0 : i32
    %c0_i32_2 = arith.constant 0 : i32
    return %arg0, %c0_i32, %c0_i32_0, %c0_i32_1 : i32, i32, i32, i32
  }
}

</mosaic_0001>

<llo_original>
// kernel: basic_block_pallas.1
$region0: #{basic_block_pallas.1}
  #allocation0 [shape = 'u32[]', space=smem, size = 0x4, offset = 0x4, fixed_abs, tag = 'smem constant byte address 0x4 - core index']
  #allocation1 [shape = 'u32[144,128]{1,0:T(1,128)}', space=vmem, size = 0x12000, scoped, tag = 'internal scratch']
  %s0 = inlined_call_operand.vmem [shape: f32[2,16,16,128], index: 0, kind: input, shape index: {}]
  %s1 = inlined_call_operand.vmem [shape: f32[3,3,128], index: 1, kind: input, shape index: {}]
  %s2 = inlined_call_operand.vmem [shape: bf16[128,128], index: 2, kind: input, shape index: {}]
  %s3 = inlined_call_operand.vmem [shape: f32[1,128], index: 3, kind: input, shape index: {}]
  %s4 = inlined_call_operand.vmem [shape: f32[1,128], index: 4, kind: input, shape index: {}]
  %s5 = inlined_call_operand.vmem [shape: f32[3,3,128], index: 5, kind: input, shape index: {}]
  %s6 = inlined_call_operand.vmem [shape: bf16[128,128], index: 6, kind: input, shape index: {}]
  %s7 = inlined_call_operand.vmem [shape: f32[1,128], index: 7, kind: input, shape index: {}]
  %s8 = inlined_call_operand.vmem [shape: f32[1,128], index: 8, kind: input, shape index: {}]
  %s9 = inlined_call_operand.vmem [shape: f32[2,16,16,128], index: 9, kind: output, shape index: {}]
  %s10 = sld [smem:[#allocation0]]
  $region69: #{basic_block_pallas.1} parent=0
    _
  %s12 = ssub.s32 1, %s10
  %s13 = scalar_select 0, %s12, %s10
  loop: start=0, step=1, limit=4
  $region2: #{basic_block_pallas.1} parent=0 // loop_pre_header
    _
  $region3: #{basic_block_pallas.1} parent=0 // loop_header
    %s15 = sphi 0, %s19
    %p16 = scmp.ge.s32.totalorder %s15, 4
    %s25 = sphi 0, %s27
    %s28 = sphi 0, %s25
    %s29 = sphi 0, %s28
    %s45 = sphi 0, %s29
    %s49 = sphi 0, %s49
    %s51 = sphi 0, %s49
    %s52 = sphi 0, %s51
    %s66 = sphi 0, %s52
    %s70 = sphi 0, %s70
    %s72 = sphi 0, %s70
    %s73 = sphi 0, %s72
    %s87 = sphi 0, %s73
    %s91 = sphi 0, %s91
    %s93 = sphi 0, %s91
    %s94 = sphi 0, %s93
    %s108 = sphi 0, %s94
    %s112 = sphi 0, %s112
    %s114 = sphi 0, %s112
    %s115 = sphi 0, %s114
    %s129 = sphi 0, %s115
    %s133 = sphi 0, %s133
    %s135 = sphi 0, %s133
    %s136 = sphi 0, %s135
    %s150 = sphi 0, %s136
    %s154 = sphi 0, %s154
    %s156 = sphi 0, %s154
    %s157 = sphi 0, %s156
    %s171 = sphi 0, %s157
    %s175 = sphi 0, %s175
    %s177 = sphi 0, %s175
    %s178 = sphi 0, %s177
    %s192 = sphi 0, %s178
    %s196 = sphi 0, %s196
    %s198 = sphi 0, %s196
    %s199 = sphi 0, %s198
    %s213 = sphi 0, %s199
    %s219 = sphi 0, %s221
    %s222 = sphi 0, %s219
    %s223 = sphi 0, %s222
    %s239 = sphi 0, %s223
  $region4: #{basic_block_pallas.1} parent=0 // loop_header_branch
    %18 = sbr.rel (%p16) target = $region8
  $region5: #{basic_block_pallas.1} parent=0 // loop_body
    %s20 = ssub.s32 %s15, 1
    %s21 = ssub.s32 %s15, 2
    %s22 = sadd.s32 %s15, 1
    %s23 = ssub.s32 %s15, %s22
    %p24 = scmp.eq.s32.totalorder %s23, 0
    %s26 = sadd.s32 %s25, 1
    %s27 = scalar_select %p24, %s25, %s26
    %p30 = pneg %p24
    %p31 = scmp.eq.s32.totalorder %s15, 1
    %p32 = por %p30, %p31
    %p33 = scmp.ne.s32.totalorder %s25, %s28
    %p34 = scmp.eq.s32.totalorder %s15, 0
    %p35 = por %p33, %p34
    %p36 = scmp.ne.s32.totalorder %s25, %s28
    %p37 = scmp.eq.s32.totalorder %s20, 1
    %p38 = por %p36, %p37
    %p39 = scmp.ne.s32.totalorder %s28, %s29
    %p40 = scmp.eq.s32.totalorder %s20, 0
    %p41 = por %p39, %p40
    %p42 = scmp.ne.s32.totalorder %s28, %s29
    %p43 = scmp.eq.s32.totalorder %s21, 1
    %p44 = por %p42, %p43
    %p46 = scmp.ne.s32.totalorder %s29, %s45
    %p47 = scmp.eq.s32.totalorder %s21, 0
    %p48 = por %p46, %p47
    %s50 = sadd.s32 %s49, 1
    %p53 = scmp.eq.s32.totalorder %s15, 1
    %p54 = scmp.ne.s32.totalorder %s49, %s51
    %p55 = scmp.eq.s32.totalorder %s15, 0
    %p56 = por %p54, %p55
    %p57 = scmp.ne.s32.totalorder %s49, %s51
    %p58 = scmp.eq.s32.totalorder %s20, 1
    %p59 = por %p57, %p58
    %p60 = scmp.ne.s32.totalorder %s51, %s52
    %p61 = scmp.eq.s32.totalorder %s20, 0
    %p62 = por %p60, %p61
    %p63 = scmp.ne.s32.totalorder %s51, %s52
    %p64 = scmp.eq.s32.totalorder %s21, 1
    %p65 = por %p63, %p64
    %p67 = scmp.ne.s32.totalorder %s52, %s66
    %p68 = scmp.eq.s32.totalorder %s21, 0
    %p69 = por %p67, %p68
    %s71 = sadd.s32 %s70, 1
    %p74 = scmp.eq.s32.totalorder %s15, 1
    %p75 = scmp.ne.s32.totalorder %s70, %s72
    %p76 = scmp.eq.s32.totalorder %s15, 0
    %p77 = por %p75, %p76
    %p78 = scmp.ne.s32.totalorder %s70, %s72
    %p79 = scmp.eq.s32.totalorder %s20, 1
    %p80 = por %p78, %p79
    %p81 = scmp.ne.s32.totalorder %s72, %s73
    %p82 = scmp.eq.s32.totalorder %s20, 0
    %p83 = por %p81, %p82
    %p84 = scmp.ne.s32.totalorder %s72, %s73
    %p85 = scmp.eq.s32.totalorder %s21, 1
    %p86 = por %p84, %p85
    %p88 = scmp.ne.s32.totalorder %s73, %s87
    %p89 = scmp.eq.s32.totalorder %s21, 0
    %p90 = por %p88, %p89
    %s92 = sadd.s32 %s91, 1
    %p95 = scmp.eq.s32.totalorder %s15, 1
    %p96 = scmp.ne.s32.totalorder %s91, %s93
    %p97 = scmp.eq.s32.totalorder %s15, 0
    %p98 = por %p96, %p97
    %p99 = scmp.ne.s32.totalorder %s91, %s93
    %p100 = scmp.eq.s32.totalorder %s20, 1
    %p101 = por %p99, %p100
    %p102 = scmp.ne.s32.totalorder %s93, %s94
    %p103 = scmp.eq.s32.totalorder %s20, 0
    %p104 = por %p102, %p103
    %p105 = scmp.ne.s32.totalorder %s93, %s94
    %p106 = scmp.eq.s32.totalorder %s21, 1
    %p107 = por %p105, %p106
    %p109 = scmp.ne.s32.totalorder %s94, %s108
    %p110 = scmp.eq.s32.totalorder %s21, 0
    %p111 = por %p109, %p110
    %s113 = sadd.s32 %s112, 1
    %p116 = scmp.eq.s32.totalorder %s15, 1
    %p117 = scmp.ne.s32.totalorder %s112, %s114
    %p118 = scmp.eq.s32.totalorder %s15, 0
    %p119 = por %p117, %p118
    %p120 = scmp.ne.s32.totalorder %s112, %s114
    %p121 = scmp.eq.s32.totalorder %s20, 1
    %p122 = por %p120, %p121
    %p123 = scmp.ne.s32.totalorder %s114, %s115
    %p124 = scmp.eq.s32.totalorder %s20, 0
    %p125 = por %p123, %p124
    %p126 = scmp.ne.s32.totalorder %s114, %s115
    %p127 = scmp.eq.s32.totalorder %s21, 1
    %p128 = por %p126, %p127
    %p130 = scmp.ne.s32.totalorder %s115, %s129
    %p131 = scmp.eq.s32.totalorder %s21, 0
    %p132 = por %p130, %p131
    %s134 = sadd.s32 %s133, 1
    %p137 = scmp.eq.s32.totalorder %s15, 1
    %p138 = scmp.ne.s32.totalorder %s133, %s135
    %p139 = scmp.eq.s32.totalorder %s15, 0
    %p140 = por %p138, %p139
    %p141 = scmp.ne.s32.totalorder %s133, %s135
    %p142 = scmp.eq.s32.totalorder %s20, 1
    %p143 = por %p141, %p142
    %p144 = scmp.ne.s32.totalorder %s135, %s136
    %p145 = scmp.eq.s32.totalorder %s20, 0
    %p146 = por %p144, %p145
    %p147 = scmp.ne.s32.totalorder %s135, %s136
    %p148 = scmp.eq.s32.totalorder %s21, 1
    %p149 = por %p147, %p148
    %p151 = scmp.ne.s32.totalorder %s136, %s150
    %p152 = scmp.eq.s32.totalorder %s21, 0
    %p153 = por %p151, %p152
    %s155 = sadd.s32 %s154, 1
    %p158 = scmp.eq.s32.totalorder %s15, 1
    %p159 = scmp.ne.s32.totalorder %s154, %s156
    %p160 = scmp.eq.s32.totalorder %s15, 0
    %p161 = por %p159, %p160
    %p162 = scmp.ne.s32.totalorder %s154, %s156
    %p163 = scmp.eq.s32.totalorder %s20, 1
    %p164 = por %p162, %p163
    %p165 = scmp.ne.s32.totalorder %s156, %s157
    %p166 = scmp.eq.s32.totalorder %s20, 0
    %p167 = por %p165, %p166
    %p168 = scmp.ne.s32.totalorder %s156, %s157
    %p169 = scmp.eq.s32.totalorder %s21, 1
    %p170 = por %p168, %p169
    %p172 = scmp.ne.s32.totalorder %s157, %s171
    %p173 = scmp.eq.s32.totalorder %s21, 0
    %p174 = por %p172, %p173
    %s176 = sadd.s32 %s175, 1
    %p179 = scmp.eq.s32.totalorder %s15, 1
    %p180 = scmp.ne.s32.totalorder %s175, %s177
    %p181 = scmp.eq.s32.totalorder %s15, 0
    %p182 = por %p180, %p181
    %p183 = scmp.ne.s32.totalorder %s175, %s177
    %p184 = scmp.eq.s32.totalorder %s20, 1
    %p185 = por %p183, %p184
    %p186 = scmp.ne.s32.totalorder %s177, %s178
    %p187 = scmp.eq.s32.totalorder %s20, 0
    %p188 = por %p186, %p187
    %p189 = scmp.ne.s32.totalorder %s177, %s178
    %p190 = scmp.eq.s32.totalorder %s21, 1
    %p191 = por %p189, %p190
    %p193 = scmp.ne.s32.totalorder %s178, %s192
    %p194 = scmp.eq.s32.totalorder %s21, 0
    %p195 = por %p193, %p194
    %s197 = sadd.s32 %s196, 1
    %p200 = scmp.eq.s32.totalorder %s15, 1
    %p201 = scmp.ne.s32.totalorder %s196, %s198
    %p202 = scmp.eq.s32.totalorder %s15, 0
    %p203 = por %p201, %p202
    %p204 = scmp.ne.s32.totalorder %s196, %s198
    %p205 = scmp.eq.s32.totalorder %s20, 1
    %p206 = por %p204, %p205
    %p207 = scmp.ne.s32.totalorder %s198, %s199
    %p208 = scmp.eq.s32.totalorder %s20, 0
    %p209 = por %p207, %p208
    %p210 = scmp.ne.s32.totalorder %s198, %s199
    %p211 = scmp.eq.s32.totalorder %s21, 1
    %p212 = por %p210, %p211
    %p214 = scmp.ne.s32.totalorder %s199, %s213
    %p215 = scmp.eq.s32.totalorder %s21, 0
    %p216 = por %p214, %p215
    %s217 = ssub.s32 %s15, %s22
    %p218 = scmp.eq.s32.totalorder %s217, 0
    %s220 = sadd.s32 %s219, 1
    %s221 = scalar_select %p218, %s219, %s220
    %p224 = pneg %p218
    %p225 = scmp.eq.s32.totalorder %s15, 1
    %p226 = por %p224, %p225
    %p227 = scmp.ne.s32.totalorder %s219, %s222
    %p228 = scmp.eq.s32.totalorder %s15, 0
    %p229 = por %p227, %p228
    %p230 = scmp.ne.s32.totalorder %s219, %s222
    %p231 = scmp.eq.s32.totalorder %s20, 1
    %p232 = por %p230, %p231
    %p233 = scmp.ne.s32.totalorder %s222, %s223
    %p234 = scmp.eq.s32.totalorder %s20, 0
    %p235 = por %p233, %p234
    %p236 = scmp.ne.s32.totalorder %s222, %s223
    %p237 = scmp.eq.s32.totalorder %s21, 1
    %p238 = por %p236, %p237
    %p240 = scmp.ne.s32.totalorder %s223, %s239
    %p241 = scmp.eq.s32.totalorder %s21, 0
    %p242 = por %p240, %p241
    %p243 = scmp.le.s32.totalorder 1, %s15
    %p244 = scmp.lt.s32.totalorder %s15, 3
    %p245 = pnand %p243, %p244
    %p246 = pneg %p245
    // Predicated region
    $region9: #{basic_block_pallas.1} parent=5 // pred_check
      _
    $region10: #{basic_block_pallas.1} parent=5 // pred_check_branch
      %248 = sbr.rel (%p245) target = $region12
    $region11: #{basic_block_pallas.1} parent=5 // pred_region
      %s249 = ssub.s32 %s15, 1
      // Predicated region
      $region13: #{basic_block_pallas.1} parent=11 // pred_check
        %p250 = pneg %p62
      $region14: #{basic_block_pallas.1} parent=11 // pred_check_branch
        %252 = sbr.rel (%p250) target = $region16
      $region15: #{basic_block_pallas.1} parent=11 // pred_region
        _
      $region16: #{basic_block_pallas.1} parent=11 // pred_fallthru
        _
      // Predicated region
      $region17: #{basic_block_pallas.1} parent=11 // pred_check
        %p253 = pneg %p83
      $region18: #{basic_block_pallas.1} parent=11 // pred_check_branch
        %255 = sbr.rel (%p253) target = $region20
      $region19: #{basic_block_pallas.1} parent=11 // pred_region
        _
      $region20: #{basic_block_pallas.1} parent=11 // pred_fallthru
        _
      // Predicated region
      $region21: #{basic_block_pallas.1} parent=11 // pred_check
        %p256 = pneg %p104
      $region22: #{basic_block_pallas.1} parent=11 // pred_check_branch
        %258 = sbr.rel (%p256) target = $region24
      $region23: #{basic_block_pallas.1} parent=11 // pred_region
        _
      $region24: #{basic_block_pallas.1} parent=11 // pred_fallthru
        _
      // Predicated region
      $region25: #{basic_block_pallas.1} parent=11 // pred_check
        %p259 = pneg %p125
      $region26: #{basic_block_pallas.1} parent=11 // pred_check_branch
        %261 = sbr.rel (%p259) target = $region28
      $region27: #{basic_block_pallas.1} parent=11 // pred_region
        _
      $region28: #{basic_block_pallas.1} parent=11 // pred_fallthru
        _
      // Predicated region
      $region29: #{basic_block_pallas.1} parent=11 // pred_check
        %p262 = pneg %p146
      $region30: #{basic_block_pallas.1} parent=11 // pred_check_branch
        %264 = sbr.rel (%p262) target = $region32
      $region31: #{basic_block_pallas.1} parent=11 // pred_region
        _
      $region32: #{basic_block_pallas.1} parent=11 // pred_fallthru
        _
      // Predicated region
      $region33: #{basic_block_pallas.1} parent=11 // pred_check
        %p265 = pneg %p167
      $region34: #{basic_block_pallas.1} parent=11 // pred_check_branch
        %267 = sbr.rel (%p265) target = $region36
      $region35: #{basic_block_pallas.1} parent=11 // pred_region
        _
      $region36: #{basic_block_pallas.1} parent=11 // pred_fallthru
        _
      // Predicated region
      $region37: #{basic_block_pallas.1} parent=11 // pred_check
        %p268 = pneg %p188
      $region38: #{basic_block_pallas.1} parent=11 // pred_check_branch
        %270 = sbr.rel (%p268) target = $region40
      $region39: #{basic_block_pallas.1} parent=11 // pred_region
        _
      $region40: #{basic_block_pallas.1} parent=11 // pred_fallthru
        _
      // Predicated region
      $region41: #{basic_block_pallas.1} parent=11 // pred_check
        %p271 = pneg %p209
      $region42: #{basic_block_pallas.1} parent=11 // pred_check_branch
        %273 = sbr.rel (%p271) target = $region44
      $region43: #{basic_block_pallas.1} parent=11 // pred_region
        _
      $region44: #{basic_block_pallas.1} parent=11 // pred_fallthru
        _
    $region12: #{basic_block_pallas.1} parent=5 // pred_fallthru
      _
    %p274 = scmp.lt.s32.totalorder %s15, 2
    // Predicated region
    $region45: #{basic_block_pallas.1} parent=5 // pred_check
      %p275 = pneg %p274
    $region46: #{basic_block_pallas.1} parent=5 // pred_check_branch
      %277 = sbr.rel (%p275) target = $region48
    $region47: #{basic_block_pallas.1} parent=5 // pred_region
      // Predicated region
      $region49: #{basic_block_pallas.1} parent=47 // pred_check
        %p278 = pneg %p35
      $region50: #{basic_block_pallas.1} parent=47 // pred_check_branch
        %280 = sbr.rel (%p278) target = $region52
      $region51: #{basic_block_pallas.1} parent=47 // pred_region
        %p281 = scmp.lt.s32.totalorder %s15, 1
        %s282 = scalar_select %p281, %s15, 1
        %s283 = smul.addr %s282, 32
        %s284 = smul.addr %s283, 8
        %s285 = scalar_lea.vmem %s0, %s284
      $region52: #{basic_block_pallas.1} parent=47 // pred_fallthru
        _
    $region48: #{basic_block_pallas.1} parent=5 // pred_fallthru
      _
    %p286 = scmp.le.s32.totalorder 1, %s15
    %p287 = scmp.lt.s32.totalorder %s15, 3
    %p288 = pnand %p286, %p287
    %p289 = pneg %p288
    // Predicated region
    $region53: #{basic_block_pallas.1} parent=5 // pred_check
      _
    $region54: #{basic_block_pallas.1} parent=5 // pred_check_branch
      %291 = sbr.rel (%p288) target = $region56
    $region55: #{basic_block_pallas.1} parent=5 // pred_region
      %s292 = ssub.s32 %s15, 1
      %p293 = scmp.lt.s32.totalorder %s20, 1
      %s294 = scalar_select %p293, %s20, 1
      %s295 = smul.addr %s294, 32
      %s296 = smul.addr %s295, 8
      %s297 = scalar_lea.vmem %s0, %s296
      %p298 = pneg %p41
      %p299 = pneg %p38
      %p300 = pneg %p62
      %p301 = pneg %p59
      %p302 = pneg %p83
      %p303 = pneg %p80
      %p304 = pneg %p104
      %p305 = pneg %p101
      %p306 = pneg %p125
      %p307 = pneg %p122
      %p308 = pneg %p146
      %p309 = pneg %p143
      %p310 = pneg %p167
      %p311 = pneg %p164
      %p312 = pneg %p188
      %p313 = pneg %p185
      %p314 = pneg %p209
      %p315 = pneg %p206
      %p316 = pneg %p235
      %p317 = pneg %p232
      %p318 = scmp.lt.s32.totalorder %s20, 1
      %s319 = scalar_select %p318, %s20, 1
      %s320 = smul.addr %s319, 32
      %s321 = smul.addr %s320, 8
      %s322 = scalar_lea.vmem %s9, %s321
      %p323 = scmp.lt.s32.totalorder %s20, 1
      %s324 = scalar_select %p323, %s20, 1
      %s325 = smul.addr %s324, 32
      %s326 = smul.addr %s325, 8
      %s327 = scalar_lea.vmem %s0, %s326
      %p328 = scmp.lt.s32.totalorder %s20, 1
      %s329 = scalar_select %p328, %s20, 1
      %s330 = smul.addr %s329, 32
      %s331 = smul.addr %s330, 8
      %s332 = scalar_lea.vmem %s9, %s331
      %v334 = vld [vmem:[%s327] sm:$0xff]
      %v335 = vld [vmem:[%s327 + $0x8] sm:$0xff]
      %v336 = vld [vmem:[%s327 + $0x10] sm:$0xff]
      %v337 = vld [vmem:[%s327 + $0x18] sm:$0xff]
      %v338 = vld [vmem:[%s327 + $0x20] sm:$0xff]
      %v339 = vld [vmem:[%s327 + $0x28] sm:$0xff]
      %v340 = vld [vmem:[%s327 + $0x30] sm:$0xff]
      %v341 = vld [vmem:[%s327 + $0x38] sm:$0xff]
      %v342 = vld [vmem:[%s327 + $0x40] sm:$0xff]
      %v343 = vld [vmem:[%s327 + $0x48] sm:$0xff]
      %v344 = vld [vmem:[%s327 + $0x50] sm:$0xff]
      %v345 = vld [vmem:[%s327 + $0x58] sm:$0xff]
      %v346 = vld [vmem:[%s327 + $0x60] sm:$0xff]
      %v347 = vld [vmem:[%s327 + $0x68] sm:$0xff]
      %v348 = vld [vmem:[%s327 + $0x70] sm:$0xff]
      %v349 = vld [vmem:[%s327 + $0x78] sm:$0xff]
      %v350 = vld [vmem:[%s327 + $0x80] sm:$0xff]
      %v351 = vld [vmem:[%s327 + $0x88] sm:$0xff]
      %v352 = vld [vmem:[%s327 + $0x90] sm:$0xff]
      %v353 = vld [vmem:[%s327 + $0x98] sm:$0xff]
      %v354 = vld [vmem:[%s327 + $0xa0] sm:$0xff]
      %v355 = vld [vmem:[%s327 + $0xa8] sm:$0xff]
      %v356 = vld [vmem:[%s327 + $0xb0] sm:$0xff]
      %v357 = vld [vmem:[%s327 + $0xb8] sm:$0xff]
      %v358 = vld [vmem:[%s327 + $0xc0] sm:$0xff]
      %v359 = vld [vmem:[%s327 + $0xc8] sm:$0xff]
      %v360 = vld [vmem:[%s327 + $0xd0] sm:$0xff]
      %v361 = vld [vmem:[%s327 + $0xd8] sm:$0xff]
      %v362 = vld [vmem:[%s327 + $0xe0] sm:$0xff]
      %v363 = vld [vmem:[%s327 + $0xe8] sm:$0xff]
      %v364 = vld [vmem:[%s327 + $0xf0] sm:$0xff]
      %v365 = vld [vmem:[%s327 + $0xf8] sm:$0xff]
      %v366 = vlaneseq
      %v367 = vshrl.u32 %v366, 7
      %v368 = vadd.s32 %v367, 8
      %vm369 = vcmp.ne.s32.totalorder %v367, 0
      %vm370 = vcmp.ne.s32.totalorder %v368, 0
      %vm371 = vcmp.ne.s32.totalorder %v367, 15
      %vm372 = vcmp.ne.s32.totalorder %v368, 15
      %v373 = vld [vmem:[%s3] sm:$0x1]
      %v374 = vld [vmem:[%s4] sm:$0x1]
      %v375 = vld [vmem:[%s7] sm:$0x1]
      %v376 = vld [vmem:[%s8] sm:$0x1]
      %v377 = vld [vmem:[%s1] sm:$0x7]
      %v378 = vld [vmem:[%s1 + $0x4] sm:$0x7]
      %v379 = vld [vmem:[%s1 + $0x8] sm:$0x7]
      %v380 = vrot.slane %v334, 7
      %v381 = vrot.slane %v336, 7
      %v382 = vrot.slane %v338, 7
      %v383 = vrot.slane %v340, 7
      %v384 = vrot.slane %v342, 7
      %v385 = vrot.slane %v344, 7
      %v386 = vrot.slane %v346, 7
      %v387 = vrot.slane %v348, 7
      %v388 = vrot.slane %v350, 7
      %v389 = vrot.slane %v352, 7
      %v390 = vrot.slane %v354, 7
      %v391 = vrot.slane %v356, 7
      %v392 = vrot.slane %v358, 7
      %v393 = vrot.slane %v360, 7
      %v394 = vrot.slane %v362, 7
      %v395 = vrot.slane %v364, 7
      %v396 = vrot.slane %v335, 7
      %v397 = vrot.slane %v337, 7
      %v398 = vrot.slane %v339, 7
      %v399 = vrot.slane %v341, 7
      %v400 = vrot.slane %v343, 7
      %v401 = vrot.slane %v345, 7
      %v402 = vrot.slane %v347, 7
      %v403 = vrot.slane %v349, 7
      %v404 = vrot.slane %v351, 7
      %v405 = vrot.slane %v353, 7
      %v406 = vrot.slane %v355, 7
      %v407 = vrot.slane %v357, 7
      %v408 = vrot.slane %v359, 7
      %v409 = vrot.slane %v361, 7
      %v410 = vrot.slane %v363, 7
      %v411 = vrot.slane %v365, 7
      %vm412 = vcmp.lt.s32.totalorder %v367, 1
      %v413 = vsel %vm412, %v380, %v396
      %v414 = vsel %vm412, %v381, %v397
      %v415 = vsel %vm412, %v382, %v398
      %v416 = vsel %vm412, %v383, %v399
      %v417 = vsel %vm412, %v384, %v400
      %v418 = vsel %vm412, %v385, %v401
      %v419 = vsel %vm412, %v386, %v402
      %v420 = vsel %vm412, %v387, %v403
      %v421 = vsel %vm412, %v388, %v404
      %v422 = vsel %vm412, %v389, %v405
      %v423 = vsel %vm412, %v390, %v406
      %v424 = vsel %vm412, %v391, %v407
      %v425 = vsel %vm412, %v392, %v408
      %v426 = vsel %vm412, %v393, %v409
      %v427 = vsel %vm412, %v394, %v410
      %v428 = vsel %vm412, %v395, %v411
      %v429 = vsel %vm412, %v396, %v380
      %v430 = vsel %vm412, %v397, %v381
      %v431 = vsel %vm412, %v398, %v382
      %v432 = vsel %vm412, %v399, %v383
      %v433 = vsel %vm412, %v400, %v384
      %v434 = vsel %vm412, %v401, %v385
      %v435 = vsel %vm412, %v402, %v386
      %v436 = vsel %vm412, %v403, %v387
      %v437 = vsel %vm412, %v404, %v388
      %v438 = vsel %vm412, %v405, %v389
      %v439 = vsel %vm412, %v406, %v390
      %v440 = vsel %vm412, %v407, %v391
      %v441 = vsel %vm412, %v408, %v392
      %v442 = vsel %vm412, %v409, %v393
      %v443 = vsel %vm412, %v410, %v394
      %v444 = vsel %vm412, %v411, %v395
      %v445 = vsel %vm369, 1, 0
      %v446 = vsel %vm370, 1, 0
      %vm447 = vcmp.eq.s32.totalorder %v445, 1
      %vm448 = vcmp.eq.s32.totalorder %v446, 1
      %v449 = vsel %vm447, %v429, 0.0
      %v450 = vsel %vm448, %v413, 0.0
      %v451 = vsel %vm447, %v430, 0.0
      %v452 = vsel %vm448, %v414, 0.0
      %v453 = vsel %vm447, %v431, 0.0
      %v454 = vsel %vm448, %v415, 0.0
      %v455 = vsel %vm447, %v432, 0.0
      %v456 = vsel %vm448, %v416, 0.0
      %v457 = vsel %vm447, %v433, 0.0
      %v458 = vsel %vm448, %v417, 0.0
      %v459 = vsel %vm447, %v434, 0.0
      %v460 = vsel %vm448, %v418, 0.0
      %v461 = vsel %vm447, %v435, 0.0
      %v462 = vsel %vm448, %v419, 0.0
      %v463 = vsel %vm447, %v436, 0.0
      %v464 = vsel %vm448, %v420, 0.0
      %v465 = vsel %vm447, %v437, 0.0
      %v466 = vsel %vm448, %v421, 0.0
      %v467 = vsel %vm447, %v438, 0.0
      %v468 = vsel %vm448, %v422, 0.0
      %v469 = vsel %vm447, %v439, 0.0
      %v470 = vsel %vm448, %v423, 0.0
      %v471 = vsel %vm447, %v440, 0.0
      %v472 = vsel %vm448, %v424, 0.0
      %v473 = vsel %vm447, %v441, 0.0
      %v474 = vsel %vm448, %v425, 0.0
      %v475 = vsel %vm447, %v442, 0.0
      %v476 = vsel %vm448, %v426, 0.0
      %v477 = vsel %vm447, %v443, 0.0
      %v478 = vsel %vm448, %v427, 0.0
      %v479 = vsel %vm447, %v444, 0.0
      %v480 = vsel %vm448, %v428, 0.0
      %v481 = vrot.slane %v334, 1
      %v482 = vrot.slane %v336, 1
      %v483 = vrot.slane %v338, 1
      %v484 = vrot.slane %v340, 1
      %v485 = vrot.slane %v342, 1
      %v486 = vrot.slane %v344, 1
      %v487 = vrot.slane %v346, 1
      %v488 = vrot.slane %v348, 1
      %v489 = vrot.slane %v350, 1
      %v490 = vrot.slane %v352, 1
      %v491 = vrot.slane %v354, 1
      %v492 = vrot.slane %v356, 1
      %v493 = vrot.slane %v358, 1
      %v494 = vrot.slane %v360, 1
      %v495 = vrot.slane %v362, 1
      %v496 = vrot.slane %v364, 1
      %v497 = vrot.slane %v335, 1
      %v498 = vrot.slane %v337, 1
      %v499 = vrot.slane %v339, 1
      %v500 = vrot.slane %v341, 1
      %v501 = vrot.slane %v343, 1
      %v502 = vrot.slane %v345, 1
      %v503 = vrot.slane %v347, 1
      %v504 = vrot.slane %v349, 1
      %v505 = vrot.slane %v351, 1
      %v506 = vrot.slane %v353, 1
      %v507 = vrot.slane %v355, 1
      %v508 = vrot.slane %v357, 1
      %v509 = vrot.slane %v359, 1
      %v510 = vrot.slane %v361, 1
      %v511 = vrot.slane %v363, 1
      %v512 = vrot.slane %v365, 1
      %vm513 = vcmp.lt.s32.totalorder %v367, 7
      %v514 = vsel %vm513, %v481, %v497
      %v515 = vsel %vm513, %v482, %v498
      %v516 = vsel %vm513, %v483, %v499
      %v517 = vsel %vm513, %v484, %v500
      %v518 = vsel %vm513, %v485, %v501
      %v519 = vsel %vm513, %v486, %v502
      %v520 = vsel %vm513, %v487, %v503
      %v521 = vsel %vm513, %v488, %v504
      %v522 = vsel %vm513, %v489, %v505
      %v523 = vsel %vm513, %v490, %v506
      %v524 = vsel %vm513, %v491, %v507
      %v525 = vsel %vm513, %v492, %v508
      %v526 = vsel %vm513, %v493, %v509
      %v527 = vsel %vm513, %v494, %v510
      %v528 = vsel %vm513, %v495, %v511
      %v529 = vsel %vm513, %v496, %v512
      %v530 = vsel %vm513, %v497, %v481
      %v531 = vsel %vm513, %v498, %v482
      %v532 = vsel %vm513, %v499, %v483
      %v533 = vsel %vm513, %v500, %v484
      %v534 = vsel %vm513, %v501, %v485
      %v535 = vsel %vm513, %v502, %v486
      %v536 = vsel %vm513, %v503, %v487
      %v537 = vsel %vm513, %v504, %v488
      %v538 = vsel %vm513, %v505, %v489
      %v539 = vsel %vm513, %v506, %v490
      %v540 = vsel %vm513, %v507, %v491
      %v541 = vsel %vm513, %v508, %v492
      %v542 = vsel %vm513, %v509, %v493
      %v543 = vsel %vm513, %v510, %v494
      %v544 = vsel %vm513, %v511, %v495
      %v545 = vsel %vm513, %v512, %v496
      %v546 = vsel %vm371, 1, 0
      %v547 = vsel %vm372, 1, 0
      %vm548 = vcmp.eq.s32.totalorder %v546, 1
      %vm549 = vcmp.eq.s32.totalorder %v547, 1
      %v550 = vsel %vm548, %v514, 0.0
      %v551 = vsel %vm549, %v530, 0.0
      %v552 = vsel %vm548, %v515, 0.0
      %v553 = vsel %vm549, %v531, 0.0
      %v554 = vsel %vm548, %v516, 0.0
      %v555 = vsel %vm549, %v532, 0.0
      %v556 = vsel %vm548, %v517, 0.0
      %v557 = vsel %vm549, %v533, 0.0
      %v558 = vsel %vm548, %v518, 0.0
      %v559 = vsel %vm549, %v534, 0.0
      %v560 = vsel %vm548, %v519, 0.0
      %v561 = vsel %vm549, %v535, 0.0
      %v562 = vsel %vm548, %v520, 0.0
      %v563 = vsel %vm549, %v536, 0.0
      %v564 = vsel %vm548, %v521, 0.0
      %v565 = vsel %vm549, %v537, 0.0
      %v566 = vsel %vm548, %v522, 0.0
      %v567 = vsel %vm549, %v538, 0.0
      %v568 = vsel %vm548, %v523, 0.0
      %v569 = vsel %vm549, %v539, 0.0
      %v570 = vsel %vm548, %v524, 0.0
      %v571 = vsel %vm549, %v540, 0.0
      %v572 = vsel %vm548, %v525, 0.0
      %v573 = vsel %vm549, %v541, 0.0
      %v574 = vsel %vm548, %v526, 0.0
      %v575 = vsel %vm549, %v542, 0.0
      %v576 = vsel %vm548, %v527, 0.0
      %v577 = vsel %vm549, %v543, 0.0
      %v578 = vsel %vm548, %v528, 0.0
      %v579 = vsel %vm549, %v544, 0.0
      %v580 = vsel %vm548, %v529, 0.0
      %v581 = vsel %vm549, %v545, 0.0
      %v582 = vlaneseq
      %v583 = vshrl.u32 %v582, 7
      %v584 = vsub.s32 0, %v583
      %v585 = vrot.slane %v377, %v584
      %v586 = vmul.f32 %v449, %v585
      %v587 = vmul.f32 %v450, %v585
      %v588 = vmul.f32 %v451, %v585
      %v589 = vmul.f32 %v452, %v585
      %v590 = vmul.f32 %v453, %v585
      %v591 = vmul.f32 %v454, %v585
      %v592 = vmul.f32 %v455, %v585
      %v593 = vmul.f32 %v456, %v585
      %v594 = vmul.f32 %v457, %v585
      %v595 = vmul.f32 %v458, %v585
      %v596 = vmul.f32 %v459, %v585
      %v597 = vmul.f32 %v460, %v585
      %v598 = vmul.f32 %v461, %v585
      %v599 = vmul.f32 %v462, %v585
      %v600 = vmul.f32 %v463, %v585
      %v601 = vmul.f32 %v464, %v585
      %v602 = vmul.f32 %v465, %v585
      %v603 = vmul.f32 %v466, %v585
      %v604 = vmul.f32 %v467, %v585
      %v605 = vmul.f32 %v468, %v585
      %v606 = vmul.f32 %v469, %v585
      %v607 = vmul.f32 %v470, %v585
      %v608 = vmul.f32 %v471, %v585
      %v609 = vmul.f32 %v472, %v585
      %v610 = vmul.f32 %v473, %v585
      %v611 = vmul.f32 %v474, %v585
      %v612 = vmul.f32 %v475, %v585
      %v613 = vmul.f32 %v476, %v585
      %v614 = vmul.f32 %v477, %v585
      %v615 = vmul.f32 %v478, %v585
      %v616 = vlaneseq
      %v617 = vshrl.u32 %v616, 7
      %v618 = vsub.s32 1, %v617
      %v619 = vrot.slane %v377, %v618
      %v620 = vmul.f32 %v334, %v619
      %v621 = vmul.f32 %v335, %v619
      %v622 = vmul.f32 %v336, %v619
      %v623 = vmul.f32 %v337, %v619
      %v624 = vmul.f32 %v338, %v619
      %v625 = vmul.f32 %v339, %v619
      %v626 = vmul.f32 %v340, %v619
      %v627 = vmul.f32 %v341, %v619
      %v628 = vmul.f32 %v342, %v619
      %v629 = vmul.f32 %v343, %v619
      %v630 = vmul.f32 %v344, %v619
      %v631 = vmul.f32 %v345, %v619
      %v632 = vmul.f32 %v346, %v619
      %v633 = vmul.f32 %v347, %v619
      %v634 = vmul.f32 %v348, %v619
      %v635 = vmul.f32 %v349, %v619
      %v636 = vmul.f32 %v350, %v619
      %v637 = vmul.f32 %v351, %v619
      %v638 = vmul.f32 %v352, %v619
      %v639 = vmul.f32 %v353, %v619
      %v640 = vmul.f32 %v354, %v619
      %v641 = vmul.f32 %v355, %v619
      %v642 = vmul.f32 %v356, %v619
      %v643 = vmul.f32 %v357, %v619
      %v644 = vmul.f32 %v358, %v619
      %v645 = vmul.f32 %v359, %v619
      %v646 = vmul.f32 %v360, %v619
      %v647 = vmul.f32 %v361, %v619
      %v648 = vmul.f32 %v362, %v619
      %v649 = vmul.f32 %v363, %v619
      %v650 = vadd.f32 %v586, %v620
      %v651 = vadd.f32 %v587, %v621
      %v652 = vadd.f32 %v588, %v622
      %v653 = vadd.f32 %v589, %v623
      %v654 = vadd.f32 %v590, %v624
      %v655 = vadd.f32 %v591, %v625
      %v656 = vadd.f32 %v592, %v626
      %v657 = vadd.f32 %v593, %v627
      %v658 = vadd.f32 %v594, %v628
      %v659 = vadd.f32 %v595, %v629
      %v660 = vadd.f32 %v596, %v630
      %v661 = vadd.f32 %v597, %v631
      %v662 = vadd.f32 %v598, %v632
      %v663 = vadd.f32 %v599, %v633
      %v664 = vadd.f32 %v600, %v634
      %v665 = vadd.f32 %v601, %v635
      %v666 = vadd.f32 %v602, %v636
      %v667 = vadd.f32 %v603, %v637
      %v668 = vadd.f32 %v604, %v638
      %v669 = vadd.f32 %v605, %v639
      %v670 = vadd.f32 %v606, %v640
      %v671 = vadd.f32 %v607, %v641
      %v672 = vadd.f32 %v608, %v642
      %v673 = vadd.f32 %v609, %v643
      %v674 = vadd.f32 %v610, %v644
      %v675 = vadd.f32 %v611, %v645
      %v676 = vadd.f32 %v612, %v646
      %v677 = vadd.f32 %v613, %v647
      %v678 = vadd.f32 %v614, %v648
      %v679 = vadd.f32 %v615, %v649
      %v680 = vlaneseq
      %v681 = vshrl.u32 %v680, 7
      %v682 = vsub.s32 2, %v681
      %v683 = vrot.slane %v377, %v682
      %v684 = vmul.f32 %v550, %v683
      %v685 = vmul.f32 %v551, %v683
      %v686 = vmul.f32 %v552, %v683
      %v687 = vmul.f32 %v553, %v683
      %v688 = vmul.f32 %v554, %v683
      %v689 = vmul.f32 %v555, %v683
      %v690 = vmul.f32 %v556, %v683
      %v691 = vmul.f32 %v557, %v683
      %v692 = vmul.f32 %v558, %v683
      %v693 = vmul.f32 %v559, %v683
      %v694 = vmul.f32 %v560, %v683
      %v695 = vmul.f32 %v561, %v683
      %v696 = vmul.f32 %v562, %v683
      %v697 = vmul.f32 %v563, %v683
      %v698 = vmul.f32 %v564, %v683
      %v699 = vmul.f32 %v565, %v683
      %v700 = vmul.f32 %v566, %v683
      %v701 = vmul.f32 %v567, %v683
      %v702 = vmul.f32 %v568, %v683
      %v703 = vmul.f32 %v569, %v683
      %v704 = vmul.f32 %v570, %v683
      %v705 = vmul.f32 %v571, %v683
      %v706 = vmul.f32 %v572, %v683
      %v707 = vmul.f32 %v573, %v683
      %v708 = vmul.f32 %v574, %v683
      %v709 = vmul.f32 %v575, %v683
      %v710 = vmul.f32 %v576, %v683
      %v711 = vmul.f32 %v577, %v683
      %v712 = vmul.f32 %v578, %v683
      %v713 = vmul.f32 %v579, %v683
      %v714 = vadd.f32 %v650, %v684
      %v715 = vadd.f32 %v651, %v685
      %v716 = vadd.f32 %v652, %v686
      %v717 = vadd.f32 %v653, %v687
      %v718 = vadd.f32 %v654, %v688
      %v719 = vadd.f32 %v655, %v689
      %v720 = vadd.f32 %v656, %v690
      %v721 = vadd.f32 %v657, %v691
      %v722 = vadd.f32 %v658, %v692
      %v723 = vadd.f32 %v659, %v693
      %v724 = vadd.f32 %v660, %v694
      %v725 = vadd.f32 %v661, %v695
      %v726 = vadd.f32 %v662, %v696
      %v727 = vadd.f32 %v663, %v697
      %v728 = vadd.f32 %v664, %v698
      %v729 = vadd.f32 %v665, %v699
      %v730 = vadd.f32 %v666, %v700
      %v731 = vadd.f32 %v667, %v701
      %v732 = vadd.f32 %v668, %v702
      %v733 = vadd.f32 %v669, %v703
      %v734 = vadd.f32 %v670, %v704
      %v735 = vadd.f32 %v671, %v705
      %v736 = vadd.f32 %v672, %v706
      %v737 = vadd.f32 %v673, %v707
      %v738 = vadd.f32 %v674, %v708
      %v739 = vadd.f32 %v675, %v709
      %v740 = vadd.f32 %v676, %v710
      %v741 = vadd.f32 %v677, %v711
      %v742 = vadd.f32 %v678, %v712
      %v743 = vadd.f32 %v679, %v713
      %v744 = vlaneseq
      %v745 = vshrl.u32 %v744, 7
      %v746 = vsub.s32 0, %v745
      %v747 = vrot.slane %v378, %v746
      %v748 = vmul.f32 %v449, %v747
      %v749 = vmul.f32 %v450, %v747
      %v750 = vmul.f32 %v451, %v747
      %v751 = vmul.f32 %v452, %v747
      %v752 = vmul.f32 %v453, %v747
      %v753 = vmul.f32 %v454, %v747
      %v754 = vmul.f32 %v455, %v747
      %v755 = vmul.f32 %v456, %v747
      %v756 = vmul.f32 %v457, %v747
      %v757 = vmul.f32 %v458, %v747
      %v758 = vmul.f32 %v459, %v747
      %v759 = vmul.f32 %v460, %v747
      %v760 = vmul.f32 %v461, %v747
      %v761 = vmul.f32 %v462, %v747
      %v762 = vmul.f32 %v463, %v747
      %v763 = vmul.f32 %v464, %v747
      %v764 = vmul.f32 %v465, %v747
      %v765 = vmul.f32 %v466, %v747
      %v766 = vmul.f32 %v467, %v747
      %v767 = vmul.f32 %v468, %v747
      %v768 = vmul.f32 %v469, %v747
      %v769 = vmul.f32 %v470, %v747
      %v770 = vmul.f32 %v471, %v747
      %v771 = vmul.f32 %v472, %v747
      %v772 = vmul.f32 %v473, %v747
      %v773 = vmul.f32 %v474, %v747
      %v774 = vmul.f32 %v475, %v747
      %v775 = vmul.f32 %v476, %v747
      %v776 = vmul.f32 %v477, %v747
      %v777 = vmul.f32 %v478, %v747
      %v778 = vmul.f32 %v479, %v747
      %v779 = vmul.f32 %v480, %v747
      %v780 = vlaneseq
      %v781 = vshrl.u32 %v780, 7
      %v782 = vsub.s32 1, %v781
      %v783 = vrot.slane %v378, %v782
      %v784 = vmul.f32 %v334, %v783
      %v785 = vmul.f32 %v335, %v783
      %v786 = vmul.f32 %v336, %v783
      %v787 = vmul.f32 %v337, %v783
      %v788 = vmul.f32 %v338, %v783
      %v789 = vmul.f32 %v339, %v783
      %v790 = vmul.f32 %v340, %v783
      %v791 = vmul.f32 %v341, %v783
      %v792 = vmul.f32 %v342, %v783
      %v793 = vmul.f32 %v343, %v783
      %v794 = vmul.f32 %v344, %v783
      %v795 = vmul.f32 %v345, %v783
      %v796 = vmul.f32 %v346, %v783
      %v797 = vmul.f32 %v347, %v783
      %v798 = vmul.f32 %v348, %v783
      %v799 = vmul.f32 %v349, %v783
      %v800 = vmul.f32 %v350, %v783
      %v801 = vmul.f32 %v351, %v783
      %v802 = vmul.f32 %v352, %v783
      %v803 = vmul.f32 %v353, %v783
      %v804 = vmul.f32 %v354, %v783
      %v805 = vmul.f32 %v355, %v783
      %v806 = vmul.f32 %v356, %v783
      %v807 = vmul.f32 %v357, %v783
      %v808 = vmul.f32 %v358, %v783
      %v809 = vmul.f32 %v359, %v783
      %v810 = vmul.f32 %v360, %v783
      %v811 = vmul.f32 %v361, %v783
      %v812 = vmul.f32 %v362, %v783
      %v813 = vmul.f32 %v363, %v783
      %v814 = vmul.f32 %v364, %v783
      %v815 = vmul.f32 %v365, %v783
      %v816 = vadd.f32 %v748, %v784
      %v817 = vadd.f32 %v749, %v785
      %v818 = vadd.f32 %v750, %v786
      %v819 = vadd.f32 %v751, %v787
      %v820 = vadd.f32 %v752, %v788
      %v821 = vadd.f32 %v753, %v789
      %v822 = vadd.f32 %v754, %v790
      %v823 = vadd.f32 %v755, %v791
      %v824 = vadd.f32 %v756, %v792
      %v825 = vadd.f32 %v757, %v793
      %v826 = vadd.f32 %v758, %v794
      %v827 = vadd.f32 %v759, %v795
      %v828 = vadd.f32 %v760, %v796
      %v829 = vadd.f32 %v761, %v797
      %v830 = vadd.f32 %v762, %v798
      %v831 = vadd.f32 %v763, %v799
      %v832 = vadd.f32 %v764, %v800
      %v833 = vadd.f32 %v765, %v801
      %v834 = vadd.f32 %v766, %v802
      %v835 = vadd.f32 %v767, %v803
      %v836 = vadd.f32 %v768, %v804
      %v837 = vadd.f32 %v769, %v805
      %v838 = vadd.f32 %v770, %v806
      %v839 = vadd.f32 %v771, %v807
      %v840 = vadd.f32 %v772, %v808
      %v841 = vadd.f32 %v773, %v809
      %v842 = vadd.f32 %v774, %v810
      %v843 = vadd.f32 %v775, %v811
      %v844 = vadd.f32 %v776, %v812
      %v845 = vadd.f32 %v777, %v813
      %v846 = vadd.f32 %v778, %v814
      %v847 = vadd.f32 %v779, %v815
      %v848 = vlaneseq
      %v849 = vshrl.u32 %v848, 7
      %v850 = vsub.s32 2, %v849
      %v851 = vrot.slane %v378, %v850
      %v852 = vmul.f32 %v550, %v851
      %v853 = vmul.f32 %v551, %v851
      %v854 = vmul.f32 %v552, %v851
      %v855 = vmul.f32 %v553, %v851
      %v856 = vmul.f32 %v554, %v851
      %v857 = vmul.f32 %v555, %v851
      %v858 = vmul.f32 %v556, %v851
      %v859 = vmul.f32 %v557, %v851
      %v860 = vmul.f32 %v558, %v851
      %v861 = vmul.f32 %v559, %v851
      %v862 = vmul.f32 %v560, %v851
      %v863 = vmul.f32 %v561, %v851
      %v864 = vmul.f32 %v562, %v851
      %v865 = vmul.f32 %v563, %v851
      %v866 = vmul.f32 %v564, %v851
      %v867 = vmul.f32 %v565, %v851
      %v868 = vmul.f32 %v566, %v851
      %v869 = vmul.f32 %v567, %v851
      %v870 = vmul.f32 %v568, %v851
      %v871 = vmul.f32 %v569, %v851
      %v872 = vmul.f32 %v570, %v851
      %v873 = vmul.f32 %v571, %v851
      %v874 = vmul.f32 %v572, %v851
      %v875 = vmul.f32 %v573, %v851
      %v876 = vmul.f32 %v574, %v851
      %v877 = vmul.f32 %v575, %v851
      %v878 = vmul.f32 %v576, %v851
      %v879 = vmul.f32 %v577, %v851
      %v880 = vmul.f32 %v578, %v851
      %v881 = vmul.f32 %v579, %v851
      %v882 = vmul.f32 %v580, %v851
      %v883 = vmul.f32 %v581, %v851
      %v884 = vadd.f32 %v816, %v852
      %v885 = vadd.f32 %v817, %v853
      %v886 = vadd.f32 %v818, %v854
      %v887 = vadd.f32 %v819, %v855
      %v888 = vadd.f32 %v820, %v856
      %v889 = vadd.f32 %v821, %v857
      %v890 = vadd.f32 %v822, %v858
      %v891 = vadd.f32 %v823, %v859
      %v892 = vadd.f32 %v824, %v860
      %v893 = vadd.f32 %v825, %v861
      %v894 = vadd.f32 %v826, %v862
      %v895 = vadd.f32 %v827, %v863
      %v896 = vadd.f32 %v828, %v864
      %v897 = vadd.f32 %v829, %v865
      %v898 = vadd.f32 %v830, %v866
      %v899 = vadd.f32 %v831, %v867
      %v900 = vadd.f32 %v832, %v868
      %v901 = vadd.f32 %v833, %v869
      %v902 = vadd.f32 %v834, %v870
      %v903 = vadd.f32 %v835, %v871
      %v904 = vadd.f32 %v836, %v872
      %v905 = vadd.f32 %v837, %v873
      %v906 = vadd.f32 %v838, %v874
      %v907 = vadd.f32 %v839, %v875
      %v908 = vadd.f32 %v840, %v876
      %v909 = vadd.f32 %v841, %v877
      %v910 = vadd.f32 %v842, %v878
      %v911 = vadd.f32 %v843, %v879
      %v912 = vadd.f32 %v844, %v880
      %v913 = vadd.f32 %v845, %v881
      %v914 = vadd.f32 %v846, %v882
      %v915 = vadd.f32 %v847, %v883
      %v916 = vlaneseq
      %v917 = vshrl.u32 %v916, 7
      %v918 = vsub.s32 0, %v917
      %v919 = vrot.slane %v379, %v918
      %v920 = vmul.f32 %v451, %v919
      %v921 = vmul.f32 %v452, %v919
      %v922 = vmul.f32 %v453, %v919
      %v923 = vmul.f32 %v454, %v919
      %v924 = vmul.f32 %v455, %v919
      %v925 = vmul.f32 %v456, %v919
      %v926 = vmul.f32 %v457, %v919
      %v927 = vmul.f32 %v458, %v919
      %v928 = vmul.f32 %v459, %v919
      %v929 = vmul.f32 %v460, %v919
      %v930 = vmul.f32 %v461, %v919
      %v931 = vmul.f32 %v462, %v919
      %v932 = vmul.f32 %v463, %v919
      %v933 = vmul.f32 %v464, %v919
      %v934 = vmul.f32 %v465, %v919
      %v935 = vmul.f32 %v466, %v919
      %v936 = vmul.f32 %v467, %v919
      %v937 = vmul.f32 %v468, %v919
      %v938 = vmul.f32 %v469, %v919
      %v939 = vmul.f32 %v470, %v919
      %v940 = vmul.f32 %v471, %v919
      %v941 = vmul.f32 %v472, %v919
      %v942 = vmul.f32 %v473, %v919
      %v943 = vmul.f32 %v474, %v919
      %v944 = vmul.f32 %v475, %v919
      %v945 = vmul.f32 %v476, %v919
      %v946 = vmul.f32 %v477, %v919
      %v947 = vmul.f32 %v478, %v919
      %v948 = vmul.f32 %v479, %v919
      %v949 = vmul.f32 %v480, %v919
      %v950 = vlaneseq
      %v951 = vshrl.u32 %v950, 7
      %v952 = vsub.s32 1, %v951
      %v953 = vrot.slane %v379, %v952
      %v954 = vmul.f32 %v336, %v953
      %v955 = vmul.f32 %v337, %v953
      %v956 = vmul.f32 %v338, %v953
      %v957 = vmul.f32 %v339, %v953
      %v958 = vmul.f32 %v340, %v953
      %v959 = vmul.f32 %v341, %v953
      %v960 = vmul.f32 %v342, %v953
      %v961 = vmul.f32 %v343, %v953
      %v962 = vmul.f32 %v344, %v953
      %v963 = vmul.f32 %v345, %v953
      %v964 = vmul.f32 %v346, %v953
      %v965 = vmul.f32 %v347, %v953
      %v966 = vmul.f32 %v348, %v953
      %v967 = vmul.f32 %v349, %v953
      %v968 = vmul.f32 %v350, %v953
      %v969 = vmul.f32 %v351, %v953
      %v970 = vmul.f32 %v352, %v953
      %v971 = vmul.f32 %v353, %v953
      %v972 = vmul.f32 %v354, %v953
      %v973 = vmul.f32 %v355, %v953
      %v974 = vmul.f32 %v356, %v953
      %v975 = vmul.f32 %v357, %v953
      %v976 = vmul.f32 %v358, %v953
      %v977 = vmul.f32 %v359, %v953
      %v978 = vmul.f32 %v360, %v953
      %v979 = vmul.f32 %v361, %v953
      %v980 = vmul.f32 %v362, %v953
      %v981 = vmul.f32 %v363, %v953
      %v982 = vmul.f32 %v364, %v953
      %v983 = vmul.f32 %v365, %v953
      %v984 = vadd.f32 %v920, %v954
      %v985 = vadd.f32 %v921, %v955
      %v986 = vadd.f32 %v922, %v956
      %v987 = vadd.f32 %v923, %v957
      %v988 = vadd.f32 %v924, %v958
      %v989 = vadd.f32 %v925, %v959
      %v990 = vadd.f32 %v926, %v960
      %v991 = vadd.f32 %v927, %v961
      %v992 = vadd.f32 %v928, %v962
      %v993 = vadd.f32 %v929, %v963
      %v994 = vadd.f32 %v930, %v964
      %v995 = vadd.f32 %v931, %v965
      %v996 = vadd.f32 %v932, %v966
      %v997 = vadd.f32 %v933, %v967
      %v998 = vadd.f32 %v934, %v968
      %v999 = vadd.f32 %v935, %v969
      %v1000 = vadd.f32 %v936, %v970
      %v1001 = vadd.f32 %v937, %v971
      %v1002 = vadd.f32 %v938, %v972
      %v1003 = vadd.f32 %v939, %v973
      %v1004 = vadd.f32 %v940, %v974
      %v1005 = vadd.f32 %v941, %v975
      %v1006 = vadd.f32 %v942, %v976
      %v1007 = vadd.f32 %v943, %v977
      %v1008 = vadd.f32 %v944, %v978
      %v1009 = vadd.f32 %v945, %v979
      %v1010 = vadd.f32 %v946, %v980
      %v1011 = vadd.f32 %v947, %v981
      %v1012 = vadd.f32 %v948, %v982
      %v1013 = vadd.f32 %v949, %v983
      %v1014 = vlaneseq
      %v1015 = vshrl.u32 %v1014, 7
      %v1016 = vsub.s32 2, %v1015
      %v1017 = vrot.slane %v379, %v1016
      %v1018 = vmul.f32 %v552, %v1017
      %v1019 = vmul.f32 %v553, %v1017
      %v1020 = vmul.f32 %v554, %v1017
      %v1021 = vmul.f32 %v555, %v1017
      %v1022 = vmul.f32 %v556, %v1017
      %v1023 = vmul.f32 %v557, %v1017
      %v1024 = vmul.f32 %v558, %v1017
      %v1025 = vmul.f32 %v559, %v1017
      %v1026 = vmul.f32 %v560, %v1017
      %v1027 = vmul.f32 %v561, %v1017
      %v1028 = vmul.f32 %v562, %v1017
      %v1029 = vmul.f32 %v563, %v1017
      %v1030 = vmul.f32 %v564, %v1017
      %v1031 = vmul.f32 %v565, %v1017
      %v1032 = vmul.f32 %v566, %v1017
      %v1033 = vmul.f32 %v567, %v1017
      %v1034 = vmul.f32 %v568, %v1017
      %v1035 = vmul.f32 %v569, %v1017
      %v1036 = vmul.f32 %v570, %v1017
      %v1037 = vmul.f32 %v571, %v1017
      %v1038 = vmul.f32 %v572, %v1017
      %v1039 = vmul.f32 %v573, %v1017
      %v1040 = vmul.f32 %v574, %v1017
      %v1041 = vmul.f32 %v575, %v1017
      %v1042 = vmul.f32 %v576, %v1017
      %v1043 = vmul.f32 %v577, %v1017
      %v1044 = vmul.f32 %v578, %v1017
      %v1045 = vmul.f32 %v579, %v1017
      %v1046 = vmul.f32 %v580, %v1017
      %v1047 = vmul.f32 %v581, %v1017
      %v1048 = vadd.f32 %v984, %v1018
      %v1049 = vadd.f32 %v985, %v1019
      %v1050 = vadd.f32 %v986, %v1020
      %v1051 = vadd.f32 %v987, %v1021
      %v1052 = vadd.f32 %v988, %v1022
      %v1053 = vadd.f32 %v989, %v1023
      %v1054 = vadd.f32 %v990, %v1024
      %v1055 = vadd.f32 %v991, %v1025
      %v1056 = vadd.f32 %v992, %v1026
      %v1057 = vadd.f32 %v993, %v1027
      %v1058 = vadd.f32 %v994, %v1028
      %v1059 = vadd.f32 %v995, %v1029
      %v1060 = vadd.f32 %v996, %v1030
      %v1061 = vadd.f32 %v997, %v1031
      %v1062 = vadd.f32 %v998, %v1032
      %v1063 = vadd.f32 %v999, %v1033
      %v1064 = vadd.f32 %v1000, %v1034
      %v1065 = vadd.f32 %v1001, %v1035
      %v1066 = vadd.f32 %v1002, %v1036
      %v1067 = vadd.f32 %v1003, %v1037
      %v1068 = vadd.f32 %v1004, %v1038
      %v1069 = vadd.f32 %v1005, %v1039
      %v1070 = vadd.f32 %v1006, %v1040
      %v1071 = vadd.f32 %v1007, %v1041
      %v1072 = vadd.f32 %v1008, %v1042
      %v1073 = vadd.f32 %v1009, %v1043
      %v1074 = vadd.f32 %v1010, %v1044
      %v1075 = vadd.f32 %v1011, %v1045
      %v1076 = vadd.f32 %v1012, %v1046
      %v1077 = vadd.f32 %v1013, %v1047
      %v1078 = vadd.f32 %v884, 0.0
      %v1079 = vadd.f32 %v885, 0.0
      %v1080 = vadd.f32 %v886, %v714
      %v1081 = vadd.f32 %v887, %v715
      %v1082 = vadd.f32 %v888, %v716
      %v1083 = vadd.f32 %v889, %v717
      %v1084 = vadd.f32 %v890, %v718
      %v1085 = vadd.f32 %v891, %v719
      %v1086 = vadd.f32 %v892, %v720
      %v1087 = vadd.f32 %v893, %v721
      %v1088 = vadd.f32 %v894, %v722
      %v1089 = vadd.f32 %v895, %v723
      %v1090 = vadd.f32 %v896, %v724
      %v1091 = vadd.f32 %v897, %v725
      %v1092 = vadd.f32 %v898, %v726
      %v1093 = vadd.f32 %v899, %v727
      %v1094 = vadd.f32 %v900, %v728
      %v1095 = vadd.f32 %v901, %v729
      %v1096 = vadd.f32 %v902, %v730
      %v1097 = vadd.f32 %v903, %v731
      %v1098 = vadd.f32 %v904, %v732
      %v1099 = vadd.f32 %v905, %v733
      %v1100 = vadd.f32 %v906, %v734
      %v1101 = vadd.f32 %v907, %v735
      %v1102 = vadd.f32 %v908, %v736
      %v1103 = vadd.f32 %v909, %v737
      %v1104 = vadd.f32 %v910, %v738
      %v1105 = vadd.f32 %v911, %v739
      %v1106 = vadd.f32 %v912, %v740
      %v1107 = vadd.f32 %v913, %v741
      %v1108 = vadd.f32 %v914, %v742
      %v1109 = vadd.f32 %v915, %v743
      %v1110 = vadd.f32 %v1078, %v1048
      %v1111 = vadd.f32 %v1079, %v1049
      %v1112 = vadd.f32 %v1080, %v1050
      %v1113 = vadd.f32 %v1081, %v1051
      %v1114 = vadd.f32 %v1082, %v1052
      %v1115 = vadd.f32 %v1083, %v1053
      %v1116 = vadd.f32 %v1084, %v1054
      %v1117 = vadd.f32 %v1085, %v1055
      %v1118 = vadd.f32 %v1086, %v1056
      %v1119 = vadd.f32 %v1087, %v1057
      %v1120 = vadd.f32 %v1088, %v1058
      %v1121 = vadd.f32 %v1089, %v1059
      %v1122 = vadd.f32 %v1090, %v1060
      %v1123 = vadd.f32 %v1091, %v1061
      %v1124 = vadd.f32 %v1092, %v1062
      %v1125 = vadd.f32 %v1093, %v1063
      %v1126 = vadd.f32 %v1094, %v1064
      %v1127 = vadd.f32 %v1095, %v1065
      %v1128 = vadd.f32 %v1096, %v1066
      %v1129 = vadd.f32 %v1097, %v1067
      %v1130 = vadd.f32 %v1098, %v1068
      %v1131 = vadd.f32 %v1099, %v1069
      %v1132 = vadd.f32 %v1100, %v1070
      %v1133 = vadd.f32 %v1101, %v1071
      %v1134 = vadd.f32 %v1102, %v1072
      %v1135 = vadd.f32 %v1103, %v1073
      %v1136 = vadd.f32 %v1104, %v1074
      %v1137 = vadd.f32 %v1105, %v1075
      %v1138 = vadd.f32 %v1106, %v1076
      %v1139 = vadd.f32 %v1107, %v1077
      %v1140 = vadd.f32 %v1108, 0.0
      %v1141 = vadd.f32 %v1109, 0.0
      %v1142 = vpack.c.bf16 %v1111, %v1110
      %v1143 = vpack.c.bf16 %v1113, %v1112
      %v1144 = vpack.c.bf16 %v1115, %v1114
      %v1145 = vpack.c.bf16 %v1117, %v1116
      %v1146 = vpack.c.bf16 %v1119, %v1118
      %v1147 = vpack.c.bf16 %v1121, %v1120
      %v1148 = vpack.c.bf16 %v1123, %v1122
      %v1149 = vpack.c.bf16 %v1125, %v1124
      %v1150 = vpack.c.bf16 %v1127, %v1126
      %v1151 = vpack.c.bf16 %v1129, %v1128
      %v1152 = vpack.c.bf16 %v1131, %v1130
      %v1153 = vpack.c.bf16 %v1133, %v1132
      %v1154 = vpack.c.bf16 %v1135, %v1134
      %v1155 = vpack.c.bf16 %v1137, %v1136
      %v1156 = vpack.c.bf16 %v1139, %v1138
      %v1157 = vpack.c.bf16 %v1141, %v1140
      %v1158 = vld [vmem:[%s2] sm:$0xf]
      %v1159 = vld [vmem:[%s2 + $0x4] sm:$0xf]
      %v1160 = vld [vmem:[%s2 + $0x8] sm:$0xf]
      %v1161 = vld [vmem:[%s2 + $0xc] sm:$0xf]
      %v1162 = vld [vmem:[%s2 + $0x10] sm:$0xf]
      %v1163 = vld [vmem:[%s2 + $0x14] sm:$0xf]
      %v1164 = vld [vmem:[%s2 + $0x18] sm:$0xf]
      %v1165 = vld [vmem:[%s2 + $0x1c] sm:$0xf]
      %v1166 = vld [vmem:[%s2 + $0x20] sm:$0xf]
      %v1167 = vld [vmem:[%s2 + $0x24] sm:$0xf]
      %v1168 = vld [vmem:[%s2 + $0x28] sm:$0xf]
      %v1169 = vld [vmem:[%s2 + $0x2c] sm:$0xf]
      %v1170 = vld [vmem:[%s2 + $0x30] sm:$0xf]
      %v1171 = vld [vmem:[%s2 + $0x34] sm:$0xf]
      %v1172 = vld [vmem:[%s2 + $0x38] sm:$0xf]
      %v1173 = vld [vmem:[%s2 + $0x3c] sm:$0xf]
      %v1190 = vunpack.c.l.b16 %v1158
      %v1191 = vunpack.c.l.b16 %v1159
      %v1192 = vunpack.c.l.b16 %v1160
      %v1193 = vunpack.c.l.b16 %v1161
      %v1194 = vunpack.c.l.b16 %v1162
      %v1195 = vunpack.c.l.b16 %v1163
      %v1196 = vunpack.c.l.b16 %v1164
      %v1197 = vunpack.c.l.b16 %v1165
      %v1198 = vunpack.c.l.b16 %v1166
      %v1199 = vunpack.c.l.b16 %v1167
      %v1200 = vunpack.c.l.b16 %v1168
      %v1201 = vunpack.c.l.b16 %v1169
      %v1202 = vunpack.c.l.b16 %v1170
      %v1203 = vunpack.c.l.b16 %v1171
      %v1204 = vunpack.c.l.b16 %v1172
      %v1205 = vunpack.c.l.b16 %v1173
      %v1206 = vpack.c.b16 %v1191, %v1190
      %v1207 = vpack.c.b16 %v1193, %v1192
      %v1208 = vpack.c.b16 %v1195, %v1194
      %v1209 = vpack.c.b16 %v1197, %v1196
      %v1210 = vpack.c.b16 %v1199, %v1198
      %v1211 = vpack.c.b16 %v1201, %v1200
      %v1212 = vpack.c.b16 %v1203, %v1202
      %v1213 = vpack.c.b16 %v1205, %v1204
      %1222 = vmatprep.subr.bf16.mxu0 0
      %1223 = vmatpush1.bf16.msra.mxu0 %v1206
      %1224 = vmatprep.subr.bf16.mxu0 0
      %1225 = vmatpush1.bf16.msra.mxu0 %v1207
      %1226 = vmatprep.subr.bf16.mxu0 0
      %1227 = vmatpush1.bf16.msra.mxu0 %v1208
      %1228 = vmatprep.subr.bf16.mxu0 0
      %1229 = vmatpush1.bf16.msra.mxu0 %v1209
      %1230 = vmatprep.subr.bf16.mxu0 0
      %1231 = vmatpush1.bf16.msra.mxu0 %v1210
      %1232 = vmatprep.subr.bf16.mxu0 0
      %1233 = vmatpush1.bf16.msra.mxu0 %v1211
      %1234 = vmatprep.subr.bf16.mxu0 0
      %1235 = vmatpush1.bf16.msra.mxu0 %v1212
      %1236 = vmatprep.subr.bf16.mxu0 0
      %1237 = vmatpush1.bf16.msra.mxu0 %v1213
      %1238 = vmatprep.subr.bf16.mxu0 0
      %1239 = vmatpush1.bf16.msra.mxu0 0
      %1240 = vmatprep.subr.bf16.mxu0 0
      %1241 = vmatpush1.bf16.msra.mxu0 0
      %1242 = vmatprep.subr.bf16.mxu0 0
      %1243 = vmatpush1.bf16.msra.mxu0 0
      %1244 = vmatprep.subr.bf16.mxu0 0
      %1245 = vmatpush1.bf16.msra.mxu0 0
      %1246 = vmatprep.subr.bf16.mxu0 0
      %1247 = vmatpush1.bf16.msra.mxu0 0
      %1248 = vmatprep.subr.bf16.mxu0 0
      %1249 = vmatpush1.bf16.msra.mxu0 0
      %1250 = vmatprep.subr.bf16.mxu0 0
      %1251 = vmatpush1.bf16.msra.mxu0 0
      %1252 = vmatprep.subr.bf16.mxu0 0
      %1253 = vmatpush1.bf16.msra.mxu0 0
      %1254 = vmatprep.mubr.bf16.mxu0 0
      %1255 = vmatmul.mubr.bf16.gmra.mrb[0].mxu0 %v1142
      %v1256 = vpop.f32.mrb[0].mxu0
      %v1257 = vadd.f32 0.0, %v1256
      %v1258 = vpop.f32.mrb[0].mxu0
      %v1259 = vpop.f32.mrb[0].mxu0
      %v1260 = vadd.f32 0.0, %v1259
      %v1261 = vpop.f32.mrb[0].mxu0
      %1262 = vmatprep.mubr.bf16.mxu0 0
      %1263 = vmatmul.mubr.bf16.gmra.mrb[0].mxu0 %v1143
      %v1264 = vpop.f32.mrb[0].mxu0
      %v1265 = vadd.f32 0.0, %v1264
      %v1266 = vpop.f32.mrb[0].mxu0
      %v1267 = vpop.f32.mrb[0].mxu0
      %v1268 = vadd.f32 0.0, %v1267
      %v1269 = vpop.f32.mrb[0].mxu0
      %1270 = vmatprep.mubr.bf16.mxu0 0
      %1271 = vmatmul.mubr.bf16.gmra.mrb[0].mxu0 %v1144
      %v1272 = vpop.f32.mrb[0].mxu0
      %v1273 = vadd.f32 0.0, %v1272
      %v1274 = vpop.f32.mrb[0].mxu0
      %v1275 = vpop.f32.mrb[0].mxu0
      %v1276 = vadd.f32 0.0, %v1275
      %v1277 = vpop.f32.mrb[0].mxu0
      %1278 = vmatprep.mubr.bf16.mxu0 0
      %1279 = vmatmul.mubr.bf16.gmra.mrb[0].mxu0 %v1145
      %v1280 = vpop.f32.mrb[0].mxu0
      %v1281 = vadd.f32 0.0, %v1280
      %v1282 = vpop.f32.mrb[0].mxu0
      %v1283 = vpop.f32.mrb[0].mxu0
      %v1284 = vadd.f32 0.0, %v1283
      %v1285 = vpop.f32.mrb[0].mxu0
      %1286 = vmatprep.mubr.bf16.mxu0 0
      %1287 = vmatmul.mubr.bf16.gmra.mrb[0].mxu0 %v1146
      %v1288 = vpop.f32.mrb[0].mxu0
      %v1289 = vadd.f32 0.0, %v1288
      %v1290 = vpop.f32.mrb[0].mxu0
      %v1291 = vpop.f32.mrb[0].mxu0
      %v1292 = vadd.f32 0.0, %v1291
      %v1293 = vpop.f32.mrb[0].mxu0
      %1294 = vmatprep.mubr.bf16.mxu0 0
      %1295 = vmatmul.mubr.bf16.gmra.mrb[0].mxu0 %v1147
      %v1296 = vpop.f32.mrb[0].mxu0
      %v1297 = vadd.f32 0.0, %v1296
      %v1298 = vpop.f32.mrb[0].mxu0
      %v1299 = vpop.f32.mrb[0].mxu0
      %v1300 = vadd.f32 0.0, %v1299
      %v1301 = vpop.f32.mrb[0].mxu0
      %1302 = vmatprep.mubr.bf16.mxu0 0
      %1303 = vmatmul.mubr.bf16.gmra.mrb[0].mxu0 %v1148
      %v1304 = vpop.f32.mrb[0].mxu0
      %v1305 = vadd.f32 0.0, %v1304
      %v1306 = vpop.f32.mrb[0].mxu0
      %v1307 = vpop.f32.mrb[0].mxu0
      %v1308 = vadd.f32 0.0, %v1307
      %v1309 = vpop.f32.mrb[0].mxu0
      %1310 = vmatprep.mubr.bf16.mxu0 0
      %1311 = vmatmul.mubr.bf16.gmra.mrb[0].mxu0 %v1149
      %v1312 = vpop.f32.mrb[0].mxu0
      %v1313 = vadd.f32 0.0, %v1312
      %v1314 = vpop.f32.mrb[0].mxu0
      %v1315 = vpop.f32.mrb[0].mxu0
      %v1316 = vadd.f32 0.0, %v1315
      %v1317 = vpop.f32.mrb[0].mxu0
      %1318 = vmatprep.mubr.bf16.mxu0 0
      %1319 = vmatmul.mubr.bf16.gmra.mrb[0].mxu0 %v1150
      %v1320 = vpop.f32.mrb[0].mxu0
      %v1321 = vadd.f32 0.0, %v1320
      %v1322 = vpop.f32.mrb[0].mxu0
      %v1323 = vpop.f32.mrb[0].mxu0
      %v1324 = vadd.f32 0.0, %v1323
      %v1325 = vpop.f32.mrb[0].mxu0
      %1326 = vmatprep.mubr.bf16.mxu0 0
      %1327 = vmatmul.mubr.bf16.gmra.mrb[0].mxu0 %v1151
      %v1328 = vpop.f32.mrb[0].mxu0
      %v1329 = vadd.f32 0.0, %v1328
      %v1330 = vpop.f32.mrb[0].mxu0
      %v1331 = vpop.f32.mrb[0].mxu0
      %v1332 = vadd.f32 0.0, %v1331
      %v1333 = vpop.f32.mrb[0].mxu0
      %1334 = vmatprep.mubr.bf16.mxu0 0
      %1335 = vmatmul.mubr.bf16.gmra.mrb[0].mxu0 %v1152
      %v1336 = vpop.f32.mrb[0].mxu0
      %v1337 = vadd.f32 0.0, %v1336
      %v1338 = vpop.f32.mrb[0].mxu0
      %v1339 = vpop.f32.mrb[0].mxu0
      %v1340 = vadd.f32 0.0, %v1339
      %v1341 = vpop.f32.mrb[0].mxu0
      %1342 = vmatprep.mubr.bf16.mxu0 0
      %1343 = vmatmul.mubr.bf16.gmra.mrb[0].mxu0 %v1153
      %v1344 = vpop.f32.mrb[0].mxu0
      %v1345 = vadd.f32 0.0, %v1344
      %v1346 = vpop.f32.mrb[0].mxu0
      %v1347 = vpop.f32.mrb[0].mxu0
      %v1348 = vadd.f32 0.0, %v1347
      %v1349 = vpop.f32.mrb[0].mxu0
      %1350 = vmatprep.mubr.bf16.mxu0 0
      %1351 = vmatmul.mubr.bf16.gmra.mrb[0].mxu0 %v1154
      %v1352 = vpop.f32.mrb[0].mxu0
      %v1353 = vadd.f32 0.0, %v1352
      %v1354 = vpop.f32.mrb[0].mxu0
      %v1355 = vpop.f32.mrb[0].mxu0
      %v1356 = vadd.f32 0.0, %v1355
      %v1357 = vpop.f32.mrb[0].mxu0
      %1358 = vmatprep.mubr.bf16.mxu0 0
      %1359 = vmatmul.mubr.bf16.gmra.mrb[0].mxu0 %v1155
      %v1360 = vpop.f32.mrb[0].mxu0
      %v1361 = vadd.f32 0.0, %v1360
      %v1362 = vpop.f32.mrb[0].mxu0
      %v1363 = vpop.f32.mrb[0].mxu0
      %v1364 = vadd.f32 0.0, %v1363
      %v1365 = vpop.f32.mrb[0].mxu0
      %1366 = vmatprep.mubr.bf16.mxu0 0
      %1367 = vmatmul.mubr.bf16.gmra.mrb[0].mxu0 %v1156
      %v1368 = vpop.f32.mrb[0].mxu0
      %v1369 = vadd.f32 0.0, %v1368
      %v1370 = vpop.f32.mrb[0].mxu0
      %v1371 = vpop.f32.mrb[0].mxu0
      %v1372 = vadd.f32 0.0, %v1371
      %v1373 = vpop.f32.mrb[0].mxu0
      %1374 = vmatprep.mubr.bf16.mxu0 0
      %1375 = vmatmul.mubr.bf16.gmra.mrb[0].mxu0 %v1157
      %v1376 = vpop.f32.mrb[0].mxu0
      %v1377 = vadd.f32 0.0, %v1376
      %v1378 = vpop.f32.mrb[0].mxu0
      %v1379 = vpop.f32.mrb[0].mxu0
      %v1380 = vadd.f32 0.0, %v1379
      %v1381 = vpop.f32.mrb[0].mxu0
      %1382 = vdwg.mxu0
      %v1384 = vlaneseq
      %v1385 = vshrl.u32 %v1384, 7
      %v1386 = vsub.s32 0, %v1385
      %v1387 = vrot.slane %v373, %v1386
      %v1389 = vmul.f32 %v1257, %v1387
      %v1390 = vmul.f32 %v1260, %v1387
      %v1391 = vmul.f32 %v1265, %v1387
      %v1392 = vmul.f32 %v1268, %v1387
      %v1393 = vmul.f32 %v1273, %v1387
      %v1394 = vmul.f32 %v1276, %v1387
      %v1395 = vmul.f32 %v1281, %v1387
      %v1396 = vmul.f32 %v1284, %v1387
      %v1397 = vmul.f32 %v1289, %v1387
      %v1398 = vmul.f32 %v1292, %v1387
      %v1399 = vmul.f32 %v1297, %v1387
      %v1400 = vmul.f32 %v1300, %v1387
      %v1401 = vmul.f32 %v1305, %v1387
      %v1402 = vmul.f32 %v1308, %v1387
      %v1403 = vmul.f32 %v1313, %v1387
      %v1404 = vmul.f32 %v1316, %v1387
      %v1405 = vmul.f32 %v1321, %v1387
      %v1406 = vmul.f32 %v1324, %v1387
      %v1407 = vmul.f32 %v1329, %v1387
      %v1408 = vmul.f32 %v1332, %v1387
      %v1409 = vmul.f32 %v1337, %v1387
      %v1410 = vmul.f32 %v1340, %v1387
      %v1411 = vmul.f32 %v1345, %v1387
      %v1412 = vmul.f32 %v1348, %v1387
      %v1413 = vmul.f32 %v1353, %v1387
      %v1414 = vmul.f32 %v1356, %v1387
      %v1415 = vmul.f32 %v1361, %v1387
      %v1416 = vmul.f32 %v1364, %v1387
      %v1417 = vmul.f32 %v1369, %v1387
      %v1418 = vmul.f32 %v1372, %v1387
      %v1419 = vmul.f32 %v1377, %v1387
      %v1420 = vmul.f32 %v1380, %v1387
      %v1422 = vlaneseq
      %v1423 = vshrl.u32 %v1422, 7
      %v1424 = vsub.s32 0, %v1423
      %v1425 = vrot.slane %v374, %v1424
      %v1427 = vadd.f32 %v1389, %v1425
      %v1428 = vadd.f32 %v1390, %v1425
      %v1429 = vadd.f32 %v1391, %v1425
      %v1430 = vadd.f32 %v1392, %v1425
      %v1431 = vadd.f32 %v1393, %v1425
      %v1432 = vadd.f32 %v1394, %v1425
      %v1433 = vadd.f32 %v1395, %v1425
      %v1434 = vadd.f32 %v1396, %v1425
      %v1435 = vadd.f32 %v1397, %v1425
      %v1436 = vadd.f32 %v1398, %v1425
      %v1437 = vadd.f32 %v1399, %v1425
      %v1438 = vadd.f32 %v1400, %v1425
      %v1439 = vadd.f32 %v1401, %v1425
      %v1440 = vadd.f32 %v1402, %v1425
      %v1441 = vadd.f32 %v1403, %v1425
      %v1442 = vadd.f32 %v1404, %v1425
      %v1443 = vadd.f32 %v1405, %v1425
      %v1444 = vadd.f32 %v1406, %v1425
      %v1445 = vadd.f32 %v1407, %v1425
      %v1446 = vadd.f32 %v1408, %v1425
      %v1447 = vadd.f32 %v1409, %v1425
      %v1448 = vadd.f32 %v1410, %v1425
      %v1449 = vadd.f32 %v1411, %v1425
      %v1450 = vadd.f32 %v1412, %v1425
      %v1451 = vadd.f32 %v1413, %v1425
      %v1452 = vadd.f32 %v1414, %v1425
      %v1453 = vadd.f32 %v1415, %v1425
      %v1454 = vadd.f32 %v1416, %v1425
      %v1455 = vadd.f32 %v1417, %v1425
      %v1456 = vadd.f32 %v1418, %v1425
      %v1457 = vadd.f32 %v1419, %v1425
      %v1458 = vadd.f32 %v1420, %v1425
      %v1459 = vmax.f32 %v1427, 0.0
      %v1460 = vmax.f32 %v1428, 0.0
      %v1461 = vmax.f32 %v1429, 0.0
      %v1462 = vmax.f32 %v1430, 0.0
      %v1463 = vmax.f32 %v1431, 0.0
      %v1464 = vmax.f32 %v1432, 0.0
      %v1465 = vmax.f32 %v1433, 0.0
      %v1466 = vmax.f32 %v1434, 0.0
      %v1467 = vmax.f32 %v1435, 0.0
      %v1468 = vmax.f32 %v1436, 0.0
      %v1469 = vmax.f32 %v1437, 0.0
      %v1470 = vmax.f32 %v1438, 0.0
      %v1471 = vmax.f32 %v1439, 0.0
      %v1472 = vmax.f32 %v1440, 0.0
      %v1473 = vmax.f32 %v1441, 0.0
      %v1474 = vmax.f32 %v1442, 0.0
      %v1475 = vmax.f32 %v1443, 0.0
      %v1476 = vmax.f32 %v1444, 0.0
      %v1477 = vmax.f32 %v1445, 0.0
      %v1478 = vmax.f32 %v1446, 0.0
      %v1479 = vmax.f32 %v1447, 0.0
      %v1480 = vmax.f32 %v1448, 0.0
      %v1481 = vmax.f32 %v1449, 0.0
      %v1482 = vmax.f32 %v1450, 0.0
      %v1483 = vmax.f32 %v1451, 0.0
      %v1484 = vmax.f32 %v1452, 0.0
      %v1485 = vmax.f32 %v1453, 0.0
      %v1486 = vmax.f32 %v1454, 0.0
      %v1487 = vmax.f32 %v1455, 0.0
      %v1488 = vmax.f32 %v1456, 0.0
      %v1489 = vmax.f32 %v1457, 0.0
      %v1490 = vmax.f32 %v1458, 0.0
      %v1491 = vld [vmem:[%s5] sm:$0x7]
      %v1492 = vld [vmem:[%s5 + $0x4] sm:$0x7]
      %v1493 = vld [vmem:[%s5 + $0x8] sm:$0x7]
      %v1494 = vrot.slane %v1459, 7
      %v1495 = vrot.slane %v1461, 7
      %v1496 = vrot.slane %v1463, 7
      %v1497 = vrot.slane %v1465, 7
      %v1498 = vrot.slane %v1467, 7
      %v1499 = vrot.slane %v1469, 7
      %v1500 = vrot.slane %v1471, 7
      %v1501 = vrot.slane %v1473, 7
      %v1502 = vrot.slane %v1475, 7
      %v1503 = vrot.slane %v1477, 7
      %v1504 = vrot.slane %v1479, 7
      %v1505 = vrot.slane %v1481, 7
      %v1506 = vrot.slane %v1483, 7
      %v1507 = vrot.slane %v1485, 7
      %v1508 = vrot.slane %v1487, 7
      %v1509 = vrot.slane %v1489, 7
      %v1510 = vrot.slane %v1460, 7
      %v1511 = vrot.slane %v1462, 7
      %v1512 = vrot.slane %v1464, 7
      %v1513 = vrot.slane %v1466, 7
      %v1514 = vrot.slane %v1468, 7
      %v1515 = vrot.slane %v1470, 7
      %v1516 = vrot.slane %v1472, 7
      %v1517 = vrot.slane %v1474, 7
      %v1518 = vrot.slane %v1476, 7
      %v1519 = vrot.slane %v1478, 7
      %v1520 = vrot.slane %v1480, 7
      %v1521 = vrot.slane %v1482, 7
      %v1522 = vrot.slane %v1484, 7
      %v1523 = vrot.slane %v1486, 7
      %v1524 = vrot.slane %v1488, 7
      %v1525 = vrot.slane %v1490, 7
      %v1526 = vsel %vm412, %v1494, %v1510
      %v1527 = vsel %vm412, %v1495, %v1511
      %v1528 = vsel %vm412, %v1496, %v1512
      %v1529 = vsel %vm412, %v1497, %v1513
      %v1530 = vsel %vm412, %v1498, %v1514
      %v1531 = vsel %vm412, %v1499, %v1515
      %v1532 = vsel %vm412, %v1500, %v1516
      %v1533 = vsel %vm412, %v1501, %v1517
      %v1534 = vsel %vm412, %v1502, %v1518
      %v1535 = vsel %vm412, %v1503, %v1519
      %v1536 = vsel %vm412, %v1504, %v1520
      %v1537 = vsel %vm412, %v1505, %v1521
      %v1538 = vsel %vm412, %v1506, %v1522
      %v1539 = vsel %vm412, %v1507, %v1523
      %v1540 = vsel %vm412, %v1508, %v1524
      %v1541 = vsel %vm412, %v1509, %v1525
      %v1542 = vsel %vm412, %v1510, %v1494
      %v1543 = vsel %vm412, %v1511, %v1495
      %v1544 = vsel %vm412, %v1512, %v1496
      %v1545 = vsel %vm412, %v1513, %v1497
      %v1546 = vsel %vm412, %v1514, %v1498
      %v1547 = vsel %vm412, %v1515, %v1499
      %v1548 = vsel %vm412, %v1516, %v1500
      %v1549 = vsel %vm412, %v1517, %v1501
      %v1550 = vsel %vm412, %v1518, %v1502
      %v1551 = vsel %vm412, %v1519, %v1503
      %v1552 = vsel %vm412, %v1520, %v1504
      %v1553 = vsel %vm412, %v1521, %v1505
      %v1554 = vsel %vm412, %v1522, %v1506
      %v1555 = vsel %vm412, %v1523, %v1507
      %v1556 = vsel %vm412, %v1524, %v1508
      %v1557 = vsel %vm412, %v1525, %v1509
      %v1558 = vsel %vm447, %v1542, 0.0
      %v1559 = vsel %vm448, %v1526, 0.0
      %v1560 = vsel %vm447, %v1543, 0.0
      %v1561 = vsel %vm448, %v1527, 0.0
      %v1562 = vsel %vm447, %v1544, 0.0
      %v1563 = vsel %vm448, %v1528, 0.0
      %v1564 = vsel %vm447, %v1545, 0.0
      %v1565 = vsel %vm448, %v1529, 0.0
      %v1566 = vsel %vm447, %v1546, 0.0
      %v1567 = vsel %vm448, %v1530, 0.0
      %v1568 = vsel %vm447, %v1547, 0.0
      %v1569 = vsel %vm448, %v1531, 0.0
      %v1570 = vsel %vm447, %v1548, 0.0
      %v1571 = vsel %vm448, %v1532, 0.0
      %v1572 = vsel %vm447, %v1549, 0.0
      %v1573 = vsel %vm448, %v1533, 0.0
      %v1574 = vsel %vm447, %v1550, 0.0
      %v1575 = vsel %vm448, %v1534, 0.0
      %v1576 = vsel %vm447, %v1551, 0.0
      %v1577 = vsel %vm448, %v1535, 0.0
      %v1578 = vsel %vm447, %v1552, 0.0
      %v1579 = vsel %vm448, %v1536, 0.0
      %v1580 = vsel %vm447, %v1553, 0.0
      %v1581 = vsel %vm448, %v1537, 0.0
      %v1582 = vsel %vm447, %v1554, 0.0
      %v1583 = vsel %vm448, %v1538, 0.0
      %v1584 = vsel %vm447, %v1555, 0.0
      %v1585 = vsel %vm448, %v1539, 0.0
      %v1586 = vsel %vm447, %v1556, 0.0
      %v1587 = vsel %vm448, %v1540, 0.0
      %v1588 = vsel %vm447, %v1557, 0.0
      %v1589 = vsel %vm448, %v1541, 0.0
      %v1590 = vrot.slane %v1459, 1
      %v1591 = vrot.slane %v1461, 1
      %v1592 = vrot.slane %v1463, 1
      %v1593 = vrot.slane %v1465, 1
      %v1594 = vrot.slane %v1467, 1
      %v1595 = vrot.slane %v1469, 1
      %v1596 = vrot.slane %v1471, 1
      %v1597 = vrot.slane %v1473, 1
      %v1598 = vrot.slane %v1475, 1
      %v1599 = vrot.slane %v1477, 1
      %v1600 = vrot.slane %v1479, 1
      %v1601 = vrot.slane %v1481, 1
      %v1602 = vrot.slane %v1483, 1
      %v1603 = vrot.slane %v1485, 1
      %v1604 = vrot.slane %v1487, 1
      %v1605 = vrot.slane %v1489, 1
      %v1606 = vrot.slane %v1460, 1
      %v1607 = vrot.slane %v1462, 1
      %v1608 = vrot.slane %v1464, 1
      %v1609 = vrot.slane %v1466, 1
      %v1610 = vrot.slane %v1468, 1
      %v1611 = vrot.slane %v1470, 1
      %v1612 = vrot.slane %v1472, 1
      %v1613 = vrot.slane %v1474, 1
      %v1614 = vrot.slane %v1476, 1
      %v1615 = vrot.slane %v1478, 1
      %v1616 = vrot.slane %v1480, 1
      %v1617 = vrot.slane %v1482, 1
      %v1618 = vrot.slane %v1484, 1
      %v1619 = vrot.slane %v1486, 1
      %v1620 = vrot.slane %v1488, 1
      %v1621 = vrot.slane %v1490, 1
      %v1622 = vsel %vm513, %v1590, %v1606
      %v1623 = vsel %vm513, %v1591, %v1607
      %v1624 = vsel %vm513, %v1592, %v1608
      %v1625 = vsel %vm513, %v1593, %v1609
      %v1626 = vsel %vm513, %v1594, %v1610
      %v1627 = vsel %vm513, %v1595, %v1611
      %v1628 = vsel %vm513, %v1596, %v1612
      %v1629 = vsel %vm513, %v1597, %v1613
      %v1630 = vsel %vm513, %v1598, %v1614
      %v1631 = vsel %vm513, %v1599, %v1615
      %v1632 = vsel %vm513, %v1600, %v1616
      %v1633 = vsel %vm513, %v1601, %v1617
      %v1634 = vsel %vm513, %v1602, %v1618
      %v1635 = vsel %vm513, %v1603, %v1619
      %v1636 = vsel %vm513, %v1604, %v1620
      %v1637 = vsel %vm513, %v1605, %v1621
      %v1638 = vsel %vm513, %v1606, %v1590
      %v1639 = vsel %vm513, %v1607, %v1591
      %v1640 = vsel %vm513, %v1608, %v1592
      %v1641 = vsel %vm513, %v1609, %v1593
      %v1642 = vsel %vm513, %v1610, %v1594
      %v1643 = vsel %vm513, %v1611, %v1595
      %v1644 = vsel %vm513, %v1612, %v1596
      %v1645 = vsel %vm513, %v1613, %v1597
      %v1646 = vsel %vm513, %v1614, %v1598
      %v1647 = vsel %vm513, %v1615, %v1599
      %v1648 = vsel %vm513, %v1616, %v1600
      %v1649 = vsel %vm513, %v1617, %v1601
      %v1650 = vsel %vm513, %v1618, %v1602
      %v1651 = vsel %vm513, %v1619, %v1603
      %v1652 = vsel %vm513, %v1620, %v1604
      %v1653 = vsel %vm513, %v1621, %v1605
      %v1654 = vsel %vm548, %v1622, 0.0
      %v1655 = vsel %vm549, %v1638, 0.0
      %v1656 = vsel %vm548, %v1623, 0.0
      %v1657 = vsel %vm549, %v1639, 0.0
      %v1658 = vsel %vm548, %v1624, 0.0
      %v1659 = vsel %vm549, %v1640, 0.0
      %v1660 = vsel %vm548, %v1625, 0.0
      %v1661 = vsel %vm549, %v1641, 0.0
      %v1662 = vsel %vm548, %v1626, 0.0
      %v1663 = vsel %vm549, %v1642, 0.0
      %v1664 = vsel %vm548, %v1627, 0.0
      %v1665 = vsel %vm549, %v1643, 0.0
      %v1666 = vsel %vm548, %v1628, 0.0
      %v1667 = vsel %vm549, %v1644, 0.0
      %v1668 = vsel %vm548, %v1629, 0.0
      %v1669 = vsel %vm549, %v1645, 0.0
      %v1670 = vsel %vm548, %v1630, 0.0
      %v1671 = vsel %vm549, %v1646, 0.0
      %v1672 = vsel %vm548, %v1631, 0.0
      %v1673 = vsel %vm549, %v1647, 0.0
      %v1674 = vsel %vm548, %v1632, 0.0
      %v1675 = vsel %vm549, %v1648, 0.0
      %v1676 = vsel %vm548, %v1633, 0.0
      %v1677 = vsel %vm549, %v1649, 0.0
      %v1678 = vsel %vm548, %v1634, 0.0
      %v1679 = vsel %vm549, %v1650, 0.0
      %v1680 = vsel %vm548, %v1635, 0.0
      %v1681 = vsel %vm549, %v1651, 0.0
      %v1682 = vsel %vm548, %v1636, 0.0
      %v1683 = vsel %vm549, %v1652, 0.0
      %v1684 = vsel %vm548, %v1637, 0.0
      %v1685 = vsel %vm549, %v1653, 0.0
      %v1686 = vlaneseq
      %v1687 = vshrl.u32 %v1686, 7
      %v1688 = vsub.s32 0, %v1687
      %v1689 = vrot.slane %v1491, %v1688
      %v1690 = vmul.f32 %v1558, %v1689
      %v1691 = vmul.f32 %v1559, %v1689
      %v1692 = vmul.f32 %v1560, %v1689
      %v1693 = vmul.f32 %v1561, %v1689
      %v1694 = vmul.f32 %v1562, %v1689
      %v1695 = vmul.f32 %v1563, %v1689
      %v1696 = vmul.f32 %v1564, %v1689
      %v1697 = vmul.f32 %v1565, %v1689
      %v1698 = vmul.f32 %v1566, %v1689
      %v1699 = vmul.f32 %v1567, %v1689
      %v1700 = vmul.f32 %v1568, %v1689
      %v1701 = vmul.f32 %v1569, %v1689
      %v1702 = vmul.f32 %v1570, %v1689
      %v1703 = vmul.f32 %v1571, %v1689
      %v1704 = vmul.f32 %v1572, %v1689
      %v1705 = vmul.f32 %v1573, %v1689
      %v1706 = vmul.f32 %v1574, %v1689
      %v1707 = vmul.f32 %v1575, %v1689
      %v1708 = vmul.f32 %v1576, %v1689
      %v1709 = vmul.f32 %v1577, %v1689
      %v1710 = vmul.f32 %v1578, %v1689
      %v1711 = vmul.f32 %v1579, %v1689
      %v1712 = vmul.f32 %v1580, %v1689
      %v1713 = vmul.f32 %v1581, %v1689
      %v1714 = vmul.f32 %v1582, %v1689
      %v1715 = vmul.f32 %v1583, %v1689
      %v1716 = vmul.f32 %v1584, %v1689
      %v1717 = vmul.f32 %v1585, %v1689
      %v1718 = vmul.f32 %v1586, %v1689
      %v1719 = vmul.f32 %v1587, %v1689
      %v1720 = vlaneseq
      %v1721 = vshrl.u32 %v1720, 7
      %v1722 = vsub.s32 1, %v1721
      %v1723 = vrot.slane %v1491, %v1722
      %v1724 = vmul.f32 %v1459, %v1723
      %v1725 = vmul.f32 %v1460, %v1723
      %v1726 = vmul.f32 %v1461, %v1723
      %v1727 = vmul.f32 %v1462, %v1723
      %v1728 = vmul.f32 %v1463, %v1723
      %v1729 = vmul.f32 %v1464, %v1723
      %v1730 = vmul.f32 %v1465, %v1723
      %v1731 = vmul.f32 %v1466, %v1723
      %v1732 = vmul.f32 %v1467, %v1723
      %v1733 = vmul.f32 %v1468, %v1723
      %v1734 = vmul.f32 %v1469, %v1723
      %v1735 = vmul.f32 %v1470, %v1723
      %v1736 = vmul.f32 %v1471, %v1723
      %v1737 = vmul.f32 %v1472, %v1723
      %v1738 = vmul.f32 %v1473, %v1723
      %v1739 = vmul.f32 %v1474, %v1723
      %v1740 = vmul.f32 %v1475, %v1723
      %v1741 = vmul.f32 %v1476, %v1723
      %v1742 = vmul.f32 %v1477, %v1723
      %v1743 = vmul.f32 %v1478, %v1723
      %v1744 = vmul.f32 %v1479, %v1723
      %v1745 = vmul.f32 %v1480, %v1723
      %v1746 = vmul.f32 %v1481, %v1723
      %v1747 = vmul.f32 %v1482, %v1723
      %v1748 = vmul.f32 %v1483, %v1723
      %v1749 = vmul.f32 %v1484, %v1723
      %v1750 = vmul.f32 %v1485, %v1723
      %v1751 = vmul.f32 %v1486, %v1723
      %v1752 = vmul.f32 %v1487, %v1723
      %v1753 = vmul.f32 %v1488, %v1723
      %v1754 = vadd.f32 %v1690, %v1724
      %v1755 = vadd.f32 %v1691, %v1725
      %v1756 = vadd.f32 %v1692, %v1726
      %v1757 = vadd.f32 %v1693, %v1727
      %v1758 = vadd.f32 %v1694, %v1728
      %v1759 = vadd.f32 %v1695, %v1729
      %v1760 = vadd.f32 %v1696, %v1730
      %v1761 = vadd.f32 %v1697, %v1731
      %v1762 = vadd.f32 %v1698, %v1732
      %v1763 = vadd.f32 %v1699, %v1733
      %v1764 = vadd.f32 %v1700, %v1734
      %v1765 = vadd.f32 %v1701, %v1735
      %v1766 = vadd.f32 %v1702, %v1736
      %v1767 = vadd.f32 %v1703, %v1737
      %v1768 = vadd.f32 %v1704, %v1738
      %v1769 = vadd.f32 %v1705, %v1739
      %v1770 = vadd.f32 %v1706, %v1740
      %v1771 = vadd.f32 %v1707, %v1741
      %v1772 = vadd.f32 %v1708, %v1742
      %v1773 = vadd.f32 %v1709, %v1743
      %v1774 = vadd.f32 %v1710, %v1744
      %v1775 = vadd.f32 %v1711, %v1745
      %v1776 = vadd.f32 %v1712, %v1746
      %v1777 = vadd.f32 %v1713, %v1747
      %v1778 = vadd.f32 %v1714, %v1748
      %v1779 = vadd.f32 %v1715, %v1749
      %v1780 = vadd.f32 %v1716, %v1750
      %v1781 = vadd.f32 %v1717, %v1751
      %v1782 = vadd.f32 %v1718, %v1752
      %v1783 = vadd.f32 %v1719, %v1753
      %v1784 = vlaneseq
      %v1785 = vshrl.u32 %v1784, 7
      %v1786 = vsub.s32 2, %v1785
      %v1787 = vrot.slane %v1491, %v1786
      %v1788 = vmul.f32 %v1654, %v1787
      %v1789 = vmul.f32 %v1655, %v1787
      %v1790 = vmul.f32 %v1656, %v1787
      %v1791 = vmul.f32 %v1657, %v1787
      %v1792 = vmul.f32 %v1658, %v1787
      %v1793 = vmul.f32 %v1659, %v1787
      %v1794 = vmul.f32 %v1660, %v1787
      %v1795 = vmul.f32 %v1661, %v1787
      %v1796 = vmul.f32 %v1662, %v1787
      %v1797 = vmul.f32 %v1663, %v1787
      %v1798 = vmul.f32 %v1664, %v1787
      %v1799 = vmul.f32 %v1665, %v1787
      %v1800 = vmul.f32 %v1666, %v1787
      %v1801 = vmul.f32 %v1667, %v1787
      %v1802 = vmul.f32 %v1668, %v1787
      %v1803 = vmul.f32 %v1669, %v1787
      %v1804 = vmul.f32 %v1670, %v1787
      %v1805 = vmul.f32 %v1671, %v1787
      %v1806 = vmul.f32 %v1672, %v1787
      %v1807 = vmul.f32 %v1673, %v1787
      %v1808 = vmul.f32 %v1674, %v1787
      %v1809 = vmul.f32 %v1675, %v1787
      %v1810 = vmul.f32 %v1676, %v1787
      %v1811 = vmul.f32 %v1677, %v1787
      %v1812 = vmul.f32 %v1678, %v1787
      %v1813 = vmul.f32 %v1679, %v1787
      %v1814 = vmul.f32 %v1680, %v1787
      %v1815 = vmul.f32 %v1681, %v1787
      %v1816 = vmul.f32 %v1682, %v1787
      %v1817 = vmul.f32 %v1683, %v1787
      %v1818 = vadd.f32 %v1754, %v1788
      %v1819 = vadd.f32 %v1755, %v1789
      %v1820 = vadd.f32 %v1756, %v1790
      %v1821 = vadd.f32 %v1757, %v1791
      %v1822 = vadd.f32 %v1758, %v1792
      %v1823 = vadd.f32 %v1759, %v1793
      %v1824 = vadd.f32 %v1760, %v1794
      %v1825 = vadd.f32 %v1761, %v1795
      %v1826 = vadd.f32 %v1762, %v1796
      %v1827 = vadd.f32 %v1763, %v1797
      %v1828 = vadd.f32 %v1764, %v1798
      %v1829 = vadd.f32 %v1765, %v1799
      %v1830 = vadd.f32 %v1766, %v1800
      %v1831 = vadd.f32 %v1767, %v1801
      %v1832 = vadd.f32 %v1768, %v1802
      %v1833 = vadd.f32 %v1769, %v1803
      %v1834 = vadd.f32 %v1770, %v1804
      %v1835 = vadd.f32 %v1771, %v1805
      %v1836 = vadd.f32 %v1772, %v1806
      %v1837 = vadd.f32 %v1773, %v1807
      %v1838 = vadd.f32 %v1774, %v1808
      %v1839 = vadd.f32 %v1775, %v1809
      %v1840 = vadd.f32 %v1776, %v1810
      %v1841 = vadd.f32 %v1777, %v1811
      %v1842 = vadd.f32 %v1778, %v1812
      %v1843 = vadd.f32 %v1779, %v1813
      %v1844 = vadd.f32 %v1780, %v1814
      %v1845 = vadd.f32 %v1781, %v1815
      %v1846 = vadd.f32 %v1782, %v1816
      %v1847 = vadd.f32 %v1783, %v1817
      %v1848 = vlaneseq
      %v1849 = vshrl.u32 %v1848, 7
      %v1850 = vsub.s32 0, %v1849
      %v1851 = vrot.slane %v1492, %v1850
      %v1852 = vmul.f32 %v1558, %v1851
      %v1853 = vmul.f32 %v1559, %v1851
      %v1854 = vmul.f32 %v1560, %v1851
      %v1855 = vmul.f32 %v1561, %v1851
      %v1856 = vmul.f32 %v1562, %v1851
      %v1857 = vmul.f32 %v1563, %v1851
      %v1858 = vmul.f32 %v1564, %v1851
      %v1859 = vmul.f32 %v1565, %v1851
      %v1860 = vmul.f32 %v1566, %v1851
      %v1861 = vmul.f32 %v1567, %v1851
      %v1862 = vmul.f32 %v1568, %v1851
      %v1863 = vmul.f32 %v1569, %v1851
      %v1864 = vmul.f32 %v1570, %v1851
      %v1865 = vmul.f32 %v1571, %v1851
      %v1866 = vmul.f32 %v1572, %v1851
      %v1867 = vmul.f32 %v1573, %v1851
      %v1868 = vmul.f32 %v1574, %v1851
      %v1869 = vmul.f32 %v1575, %v1851
      %v1870 = vmul.f32 %v1576, %v1851
      %v1871 = vmul.f32 %v1577, %v1851
      %v1872 = vmul.f32 %v1578, %v1851
      %v1873 = vmul.f32 %v1579, %v1851
      %v1874 = vmul.f32 %v1580, %v1851
      %v1875 = vmul.f32 %v1581, %v1851
      %v1876 = vmul.f32 %v1582, %v1851
      %v1877 = vmul.f32 %v1583, %v1851
      %v1878 = vmul.f32 %v1584, %v1851
      %v1879 = vmul.f32 %v1585, %v1851
      %v1880 = vmul.f32 %v1586, %v1851
      %v1881 = vmul.f32 %v1587, %v1851
      %v1882 = vmul.f32 %v1588, %v1851
      %v1883 = vmul.f32 %v1589, %v1851
      %v1884 = vlaneseq
      %v1885 = vshrl.u32 %v1884, 7
      %v1886 = vsub.s32 1, %v1885
      %v1887 = vrot.slane %v1492, %v1886
      %v1888 = vmul.f32 %v1459, %v1887
      %v1889 = vmul.f32 %v1460, %v1887
      %v1890 = vmul.f32 %v1461, %v1887
      %v1891 = vmul.f32 %v1462, %v1887
      %v1892 = vmul.f32 %v1463, %v1887
      %v1893 = vmul.f32 %v1464, %v1887
      %v1894 = vmul.f32 %v1465, %v1887
      %v1895 = vmul.f32 %v1466, %v1887
      %v1896 = vmul.f32 %v1467, %v1887
      %v1897 = vmul.f32 %v1468, %v1887
      %v1898 = vmul.f32 %v1469, %v1887
      %v1899 = vmul.f32 %v1470, %v1887
      %v1900 = vmul.f32 %v1471, %v1887
      %v1901 = vmul.f32 %v1472, %v1887
      %v1902 = vmul.f32 %v1473, %v1887
      %v1903 = vmul.f32 %v1474, %v1887
      %v1904 = vmul.f32 %v1475, %v1887
      %v1905 = vmul.f32 %v1476, %v1887
      %v1906 = vmul.f32 %v1477, %v1887
      %v1907 = vmul.f32 %v1478, %v1887
      %v1908 = vmul.f32 %v1479, %v1887
      %v1909 = vmul.f32 %v1480, %v1887
      %v1910 = vmul.f32 %v1481, %v1887
      %v1911 = vmul.f32 %v1482, %v1887
      %v1912 = vmul.f32 %v1483, %v1887
      %v1913 = vmul.f32 %v1484, %v1887
      %v1914 = vmul.f32 %v1485, %v1887
      %v1915 = vmul.f32 %v1486, %v1887
      %v1916 = vmul.f32 %v1487, %v1887
      %v1917 = vmul.f32 %v1488, %v1887
      %v1918 = vmul.f32 %v1489, %v1887
      %v1919 = vmul.f32 %v1490, %v1887
      %v1920 = vadd.f32 %v1852, %v1888
      %v1921 = vadd.f32 %v1853, %v1889
      %v1922 = vadd.f32 %v1854, %v1890
      %v1923 = vadd.f32 %v1855, %v1891
      %v1924 = vadd.f32 %v1856, %v1892
      %v1925 = vadd.f32 %v1857, %v1893
      %v1926 = vadd.f32 %v1858, %v1894
      %v1927 = vadd.f32 %v1859, %v1895
      %v1928 = vadd.f32 %v1860, %v1896
      %v1929 = vadd.f32 %v1861, %v1897
      %v1930 = vadd.f32 %v1862, %v1898
      %v1931 = vadd.f32 %v1863, %v1899
      %v1932 = vadd.f32 %v1864, %v1900
      %v1933 = vadd.f32 %v1865, %v1901
      %v1934 = vadd.f32 %v1866, %v1902
      %v1935 = vadd.f32 %v1867, %v1903
      %v1936 = vadd.f32 %v1868, %v1904
      %v1937 = vadd.f32 %v1869, %v1905
      %v1938 = vadd.f32 %v1870, %v1906
      %v1939 = vadd.f32 %v1871, %v1907
      %v1940 = vadd.f32 %v1872, %v1908
      %v1941 = vadd.f32 %v1873, %v1909
      %v1942 = vadd.f32 %v1874, %v1910
      %v1943 = vadd.f32 %v1875, %v1911
      %v1944 = vadd.f32 %v1876, %v1912
      %v1945 = vadd.f32 %v1877, %v1913
      %v1946 = vadd.f32 %v1878, %v1914
      %v1947 = vadd.f32 %v1879, %v1915
      %v1948 = vadd.f32 %v1880, %v1916
      %v1949 = vadd.f32 %v1881, %v1917
      %v1950 = vadd.f32 %v1882, %v1918
      %v1951 = vadd.f32 %v1883, %v1919
      %v1952 = vlaneseq
      %v1953 = vshrl.u32 %v1952, 7
      %v1954 = vsub.s32 2, %v1953
      %v1955 = vrot.slane %v1492, %v1954
      %v1956 = vmul.f32 %v1654, %v1955
      %v1957 = vmul.f32 %v1655, %v1955
      %v1958 = vmul.f32 %v1656, %v1955
      %v1959 = vmul.f32 %v1657, %v1955
      %v1960 = vmul.f32 %v1658, %v1955
      %v1961 = vmul.f32 %v1659, %v1955
      %v1962 = vmul.f32 %v1660, %v1955
      %v1963 = vmul.f32 %v1661, %v1955
      %v1964 = vmul.f32 %v1662, %v1955
      %v1965 = vmul.f32 %v1663, %v1955
      %v1966 = vmul.f32 %v1664, %v1955
      %v1967 = vmul.f32 %v1665, %v1955
      %v1968 = vmul.f32 %v1666, %v1955
      %v1969 = vmul.f32 %v1667, %v1955
      %v1970 = vmul.f32 %v1668, %v1955
      %v1971 = vmul.f32 %v1669, %v1955
      %v1972 = vmul.f32 %v1670, %v1955
      %v1973 = vmul.f32 %v1671, %v1955
      %v1974 = vmul.f32 %v1672, %v1955
      %v1975 = vmul.f32 %v1673, %v1955
      %v1976 = vmul.f32 %v1674, %v1955
      %v1977 = vmul.f32 %v1675, %v1955
      %v1978 = vmul.f32 %v1676, %v1955
      %v1979 = vmul.f32 %v1677, %v1955
      %v1980 = vmul.f32 %v1678, %v1955
      %v1981 = vmul.f32 %v1679, %v1955
      %v1982 = vmul.f32 %v1680, %v1955
      %v1983 = vmul.f32 %v1681, %v1955
      %v1984 = vmul.f32 %v1682, %v1955
      %v1985 = vmul.f32 %v1683, %v1955
      %v1986 = vmul.f32 %v1684, %v1955
      %v1987 = vmul.f32 %v1685, %v1955
      %v1988 = vadd.f32 %v1920, %v1956
      %v1989 = vadd.f32 %v1921, %v1957
      %v1990 = vadd.f32 %v1922, %v1958
      %v1991 = vadd.f32 %v1923, %v1959
      %v1992 = vadd.f32 %v1924, %v1960
      %v1993 = vadd.f32 %v1925, %v1961
      %v1994 = vadd.f32 %v1926, %v1962
      %v1995 = vadd.f32 %v1927, %v1963
      %v1996 = vadd.f32 %v1928, %v1964
      %v1997 = vadd.f32 %v1929, %v1965
      %v1998 = vadd.f32 %v1930, %v1966
      %v1999 = vadd.f32 %v1931, %v1967
      %v2000 = vadd.f32 %v1932, %v1968
      %v2001 = vadd.f32 %v1933, %v1969
      %v2002 = vadd.f32 %v1934, %v1970
      %v2003 = vadd.f32 %v1935, %v1971
      %v2004 = vadd.f32 %v1936, %v1972
      %v2005 = vadd.f32 %v1937, %v1973
      %v2006 = vadd.f32 %v1938, %v1974
      %v2007 = vadd.f32 %v1939, %v1975
      %v2008 = vadd.f32 %v1940, %v1976
      %v2009 = vadd.f32 %v1941, %v1977
      %v2010 = vadd.f32 %v1942, %v1978
      %v2011 = vadd.f32 %v1943, %v1979
      %v2012 = vadd.f32 %v1944, %v1980
      %v2013 = vadd.f32 %v1945, %v1981
      %v2014 = vadd.f32 %v1946, %v1982
      %v2015 = vadd.f32 %v1947, %v1983
      %v2016 = vadd.f32 %v1948, %v1984
      %v2017 = vadd.f32 %v1949, %v1985
      %v2018 = vadd.f32 %v1950, %v1986
      %v2019 = vadd.f32 %v1951, %v1987
      %v2020 = vlaneseq
      %v2021 = vshrl.u32 %v2020, 7
      %v2022 = vsub.s32 0, %v2021
      %v2023 = vrot.slane %v1493, %v2022
      %v2024 = vmul.f32 %v1560, %v2023
      %v2025 = vmul.f32 %v1561, %v2023
      %v2026 = vmul.f32 %v1562, %v2023
      %v2027 = vmul.f32 %v1563, %v2023
      %v2028 = vmul.f32 %v1564, %v2023
      %v2029 = vmul.f32 %v1565, %v2023
      %v2030 = vmul.f32 %v1566, %v2023
      %v2031 = vmul.f32 %v1567, %v2023
      %v2032 = vmul.f32 %v1568, %v2023
      %v2033 = vmul.f32 %v1569, %v2023
      %v2034 = vmul.f32 %v1570, %v2023
      %v2035 = vmul.f32 %v1571, %v2023
      %v2036 = vmul.f32 %v1572, %v2023
      %v2037 = vmul.f32 %v1573, %v2023
      %v2038 = vmul.f32 %v1574, %v2023
      %v2039 = vmul.f32 %v1575, %v2023
      %v2040 = vmul.f32 %v1576, %v2023
      %v2041 = vmul.f32 %v1577, %v2023
      %v2042 = vmul.f32 %v1578, %v2023
      %v2043 = vmul.f32 %v1579, %v2023
      %v2044 = vmul.f32 %v1580, %v2023
      %v2045 = vmul.f32 %v1581, %v2023
      %v2046 = vmul.f32 %v1582, %v2023
      %v2047 = vmul.f32 %v1583, %v2023
      %v2048 = vmul.f32 %v1584, %v2023
      %v2049 = vmul.f32 %v1585, %v2023
      %v2050 = vmul.f32 %v1586, %v2023
      %v2051 = vmul.f32 %v1587, %v2023
      %v2052 = vmul.f32 %v1588, %v2023
      %v2053 = vmul.f32 %v1589, %v2023
      %v2054 = vlaneseq
      %v2055 = vshrl.u32 %v2054, 7
      %v2056 = vsub.s32 1, %v2055
      %v2057 = vrot.slane %v1493, %v2056
      %v2058 = vmul.f32 %v1461, %v2057
      %v2059 = vmul.f32 %v1462, %v2057
      %v2060 = vmul.f32 %v1463, %v2057
      %v2061 = vmul.f32 %v1464, %v2057
      %v2062 = vmul.f32 %v1465, %v2057
      %v2063 = vmul.f32 %v1466, %v2057
      %v2064 = vmul.f32 %v1467, %v2057
      %v2065 = vmul.f32 %v1468, %v2057
      %v2066 = vmul.f32 %v1469, %v2057
      %v2067 = vmul.f32 %v1470, %v2057
      %v2068 = vmul.f32 %v1471, %v2057
      %v2069 = vmul.f32 %v1472, %v2057
      %v2070 = vmul.f32 %v1473, %v2057
      %v2071 = vmul.f32 %v1474, %v2057
      %v2072 = vmul.f32 %v1475, %v2057
      %v2073 = vmul.f32 %v1476, %v2057
      %v2074 = vmul.f32 %v1477, %v2057
      %v2075 = vmul.f32 %v1478, %v2057
      %v2076 = vmul.f32 %v1479, %v2057
      %v2077 = vmul.f32 %v1480, %v2057
      %v2078 = vmul.f32 %v1481, %v2057
      %v2079 = vmul.f32 %v1482, %v2057
      %v2080 = vmul.f32 %v1483, %v2057
      %v2081 = vmul.f32 %v1484, %v2057
      %v2082 = vmul.f32 %v1485, %v2057
      %v2083 = vmul.f32 %v1486, %v2057
      %v2084 = vmul.f32 %v1487, %v2057
      %v2085 = vmul.f32 %v1488, %v2057
      %v2086 = vmul.f32 %v1489, %v2057
      %v2087 = vmul.f32 %v1490, %v2057
      %v2088 = vadd.f32 %v2024, %v2058
      %v2089 = vadd.f32 %v2025, %v2059
      %v2090 = vadd.f32 %v2026, %v2060
      %v2091 = vadd.f32 %v2027, %v2061
      %v2092 = vadd.f32 %v2028, %v2062
      %v2093 = vadd.f32 %v2029, %v2063
      %v2094 = vadd.f32 %v2030, %v2064
      %v2095 = vadd.f32 %v2031, %v2065
      %v2096 = vadd.f32 %v2032, %v2066
      %v2097 = vadd.f32 %v2033, %v2067
      %v2098 = vadd.f32 %v2034, %v2068
      %v2099 = vadd.f32 %v2035, %v2069
      %v2100 = vadd.f32 %v2036, %v2070
      %v2101 = vadd.f32 %v2037, %v2071
      %v2102 = vadd.f32 %v2038, %v2072
      %v2103 = vadd.f32 %v2039, %v2073
      %v2104 = vadd.f32 %v2040, %v2074
      %v2105 = vadd.f32 %v2041, %v2075
      %v2106 = vadd.f32 %v2042, %v2076
      %v2107 = vadd.f32 %v2043, %v2077
      %v2108 = vadd.f32 %v2044, %v2078
      %v2109 = vadd.f32 %v2045, %v2079
      %v2110 = vadd.f32 %v2046, %v2080
      %v2111 = vadd.f32 %v2047, %v2081
      %v2112 = vadd.f32 %v2048, %v2082
      %v2113 = vadd.f32 %v2049, %v2083
      %v2114 = vadd.f32 %v2050, %v2084
      %v2115 = vadd.f32 %v2051, %v2085
      %v2116 = vadd.f32 %v2052, %v2086
      %v2117 = vadd.f32 %v2053, %v2087
      %v2118 = vlaneseq
      %v2119 = vshrl.u32 %v2118, 7
      %v2120 = vsub.s32 2, %v2119
      %v2121 = vrot.slane %v1493, %v2120
      %v2122 = vmul.f32 %v1656, %v2121
      %v2123 = vmul.f32 %v1657, %v2121
      %v2124 = vmul.f32 %v1658, %v2121
      %v2125 = vmul.f32 %v1659, %v2121
      %v2126 = vmul.f32 %v1660, %v2121
      %v2127 = vmul.f32 %v1661, %v2121
      %v2128 = vmul.f32 %v1662, %v2121
      %v2129 = vmul.f32 %v1663, %v2121
      %v2130 = vmul.f32 %v1664, %v2121
      %v2131 = vmul.f32 %v1665, %v2121
      %v2132 = vmul.f32 %v1666, %v2121
      %v2133 = vmul.f32 %v1667, %v2121
      %v2134 = vmul.f32 %v1668, %v2121
      %v2135 = vmul.f32 %v1669, %v2121
      %v2136 = vmul.f32 %v1670, %v2121
      %v2137 = vmul.f32 %v1671, %v2121
      %v2138 = vmul.f32 %v1672, %v2121
      %v2139 = vmul.f32 %v1673, %v2121
      %v2140 = vmul.f32 %v1674, %v2121
      %v2141 = vmul.f32 %v1675, %v2121
      %v2142 = vmul.f32 %v1676, %v2121
      %v2143 = vmul.f32 %v1677, %v2121
      %v2144 = vmul.f32 %v1678, %v2121
      %v2145 = vmul.f32 %v1679, %v2121
      %v2146 = vmul.f32 %v1680, %v2121
      %v2147 = vmul.f32 %v1681, %v2121
      %v2148 = vmul.f32 %v1682, %v2121
      %v2149 = vmul.f32 %v1683, %v2121
      %v2150 = vmul.f32 %v1684, %v2121
      %v2151 = vmul.f32 %v1685, %v2121
      %v2152 = vadd.f32 %v2088, %v2122
      %v2153 = vadd.f32 %v2089, %v2123
      %v2154 = vadd.f32 %v2090, %v2124
      %v2155 = vadd.f32 %v2091, %v2125
      %v2156 = vadd.f32 %v2092, %v2126
      %v2157 = vadd.f32 %v2093, %v2127
      %v2158 = vadd.f32 %v2094, %v2128
      %v2159 = vadd.f32 %v2095, %v2129
      %v2160 = vadd.f32 %v2096, %v2130
      %v2161 = vadd.f32 %v2097, %v2131
      %v2162 = vadd.f32 %v2098, %v2132
      %v2163 = vadd.f32 %v2099, %v2133
      %v2164 = vadd.f32 %v2100, %v2134
      %v2165 = vadd.f32 %v2101, %v2135
      %v2166 = vadd.f32 %v2102, %v2136
      %v2167 = vadd.f32 %v2103, %v2137
      %v2168 = vadd.f32 %v2104, %v2138
      %v2169 = vadd.f32 %v2105, %v2139
      %v2170 = vadd.f32 %v2106, %v2140
      %v2171 = vadd.f32 %v2107, %v2141
      %v2172 = vadd.f32 %v2108, %v2142
      %v2173 = vadd.f32 %v2109, %v2143
      %v2174 = vadd.f32 %v2110, %v2144
      %v2175 = vadd.f32 %v2111, %v2145
      %v2176 = vadd.f32 %v2112, %v2146
      %v2177 = vadd.f32 %v2113, %v2147
      %v2178 = vadd.f32 %v2114, %v2148
      %v2179 = vadd.f32 %v2115, %v2149
      %v2180 = vadd.f32 %v2116, %v2150
      %v2181 = vadd.f32 %v2117, %v2151
      %v2182 = vadd.f32 %v1988, 0.0
      %v2183 = vadd.f32 %v1989, 0.0
      %v2184 = vadd.f32 %v1990, %v1818
      %v2185 = vadd.f32 %v1991, %v1819
      %v2186 = vadd.f32 %v1992, %v1820
      %v2187 = vadd.f32 %v1993, %v1821
      %v2188 = vadd.f32 %v1994, %v1822
      %v2189 = vadd.f32 %v1995, %v1823
      %v2190 = vadd.f32 %v1996, %v1824
      %v2191 = vadd.f32 %v1997, %v1825
      %v2192 = vadd.f32 %v1998, %v1826
      %v2193 = vadd.f32 %v1999, %v1827
      %v2194 = vadd.f32 %v2000, %v1828
      %v2195 = vadd.f32 %v2001, %v1829
      %v2196 = vadd.f32 %v2002, %v1830
      %v2197 = vadd.f32 %v2003, %v1831
      %v2198 = vadd.f32 %v2004, %v1832
      %v2199 = vadd.f32 %v2005, %v1833
      %v2200 = vadd.f32 %v2006, %v1834
      %v2201 = vadd.f32 %v2007, %v1835
      %v2202 = vadd.f32 %v2008, %v1836
      %v2203 = vadd.f32 %v2009, %v1837
      %v2204 = vadd.f32 %v2010, %v1838
      %v2205 = vadd.f32 %v2011, %v1839
      %v2206 = vadd.f32 %v2012, %v1840
      %v2207 = vadd.f32 %v2013, %v1841
      %v2208 = vadd.f32 %v2014, %v1842
      %v2209 = vadd.f32 %v2015, %v1843
      %v2210 = vadd.f32 %v2016, %v1844
      %v2211 = vadd.f32 %v2017, %v1845
      %v2212 = vadd.f32 %v2018, %v1846
      %v2213 = vadd.f32 %v2019, %v1847
      %v2214 = vadd.f32 %v2182, %v2152
      %v2215 = vadd.f32 %v2183, %v2153
      %v2216 = vadd.f32 %v2184, %v2154
      %v2217 = vadd.f32 %v2185, %v2155
      %v2218 = vadd.f32 %v2186, %v2156
      %v2219 = vadd.f32 %v2187, %v2157
      %v2220 = vadd.f32 %v2188, %v2158
      %v2221 = vadd.f32 %v2189, %v2159
      %v2222 = vadd.f32 %v2190, %v2160
      %v2223 = vadd.f32 %v2191, %v2161
      %v2224 = vadd.f32 %v2192, %v2162
      %v2225 = vadd.f32 %v2193, %v2163
      %v2226 = vadd.f32 %v2194, %v2164
      %v2227 = vadd.f32 %v2195, %v2165
      %v2228 = vadd.f32 %v2196, %v2166
      %v2229 = vadd.f32 %v2197, %v2167
      %v2230 = vadd.f32 %v2198, %v2168
      %v2231 = vadd.f32 %v2199, %v2169
      %v2232 = vadd.f32 %v2200, %v2170
      %v2233 = vadd.f32 %v2201, %v2171
      %v2234 = vadd.f32 %v2202, %v2172
      %v2235 = vadd.f32 %v2203, %v2173
      %v2236 = vadd.f32 %v2204, %v2174
      %v2237 = vadd.f32 %v2205, %v2175
      %v2238 = vadd.f32 %v2206, %v2176
      %v2239 = vadd.f32 %v2207, %v2177
      %v2240 = vadd.f32 %v2208, %v2178
      %v2241 = vadd.f32 %v2209, %v2179
      %v2242 = vadd.f32 %v2210, %v2180
      %v2243 = vadd.f32 %v2211, %v2181
      %v2244 = vadd.f32 %v2212, 0.0
      %v2245 = vadd.f32 %v2213, 0.0
      %v2246 = vpack.c.bf16 %v2215, %v2214
      %v2247 = vpack.c.bf16 %v2217, %v2216
      %v2248 = vpack.c.bf16 %v2219, %v2218
      %v2249 = vpack.c.bf16 %v2221, %v2220
      %v2250 = vpack.c.bf16 %v2223, %v2222
      %v2251 = vpack.c.bf16 %v2225, %v2224
      %v2252 = vpack.c.bf16 %v2227, %v2226
      %v2253 = vpack.c.bf16 %v2229, %v2228
      %v2254 = vpack.c.bf16 %v2231, %v2230
      %v2255 = vpack.c.bf16 %v2233, %v2232
      %v2256 = vpack.c.bf16 %v2235, %v2234
      %v2257 = vpack.c.bf16 %v2237, %v2236
      %v2258 = vpack.c.bf16 %v2239, %v2238
      %v2259 = vpack.c.bf16 %v2241, %v2240
      %v2260 = vpack.c.bf16 %v2243, %v2242
      %v2261 = vpack.c.bf16 %v2245, %v2244
      %v2262 = vld [vmem:[%s6] sm:$0xf]
      %v2263 = vld [vmem:[%s6 + $0x4] sm:$0xf]
      %v2264 = vld [vmem:[%s6 + $0x8] sm:$0xf]
      %v2265 = vld [vmem:[%s6 + $0xc] sm:$0xf]
      %v2266 = vld [vmem:[%s6 + $0x10] sm:$0xf]
      %v2267 = vld [vmem:[%s6 + $0x14] sm:$0xf]
      %v2268 = vld [vmem:[%s6 + $0x18] sm:$0xf]
      %v2269 = vld [vmem:[%s6 + $0x1c] sm:$0xf]
      %v2270 = vld [vmem:[%s6 + $0x20] sm:$0xf]
      %v2271 = vld [vmem:[%s6 + $0x24] sm:$0xf]
      %v2272 = vld [vmem:[%s6 + $0x28] sm:$0xf]
      %v2273 = vld [vmem:[%s6 + $0x2c] sm:$0xf]
      %v2274 = vld [vmem:[%s6 + $0x30] sm:$0xf]
      %v2275 = vld [vmem:[%s6 + $0x34] sm:$0xf]
      %v2276 = vld [vmem:[%s6 + $0x38] sm:$0xf]
      %v2277 = vld [vmem:[%s6 + $0x3c] sm:$0xf]
      %v2294 = vunpack.c.l.b16 %v2262
      %v2295 = vunpack.c.l.b16 %v2263
      %v2296 = vunpack.c.l.b16 %v2264
      %v2297 = vunpack.c.l.b16 %v2265
      %v2298 = vunpack.c.l.b16 %v2266
      %v2299 = vunpack.c.l.b16 %v2267
      %v2300 = vunpack.c.l.b16 %v2268
      %v2301 = vunpack.c.l.b16 %v2269
      %v2302 = vunpack.c.l.b16 %v2270
      %v2303 = vunpack.c.l.b16 %v2271
      %v2304 = vunpack.c.l.b16 %v2272
      %v2305 = vunpack.c.l.b16 %v2273
      %v2306 = vunpack.c.l.b16 %v2274
      %v2307 = vunpack.c.l.b16 %v2275
      %v2308 = vunpack.c.l.b16 %v2276
      %v2309 = vunpack.c.l.b16 %v2277
      %v2310 = vpack.c.b16 %v2295, %v2294
      %v2311 = vpack.c.b16 %v2297, %v2296
      %v2312 = vpack.c.b16 %v2299, %v2298
      %v2313 = vpack.c.b16 %v2301, %v2300
      %v2314 = vpack.c.b16 %v2303, %v2302
      %v2315 = vpack.c.b16 %v2305, %v2304
      %v2316 = vpack.c.b16 %v2307, %v2306
      %v2317 = vpack.c.b16 %v2309, %v2308
      %2326 = vmatprep.subr.bf16.mxu0 0
      %2327 = vmatpush1.bf16.msra.mxu0 %v2310
      %2328 = vmatprep.subr.bf16.mxu0 0
      %2329 = vmatpush1.bf16.msra.mxu0 %v2311
      %2330 = vmatprep.subr.bf16.mxu0 0
      %2331 = vmatpush1.bf16.msra.mxu0 %v2312
      %2332 = vmatprep.subr.bf16.mxu0 0
      %2333 = vmatpush1.bf16.msra.mxu0 %v2313
      %2334 = vmatprep.subr.bf16.mxu0 0
      %2335 = vmatpush1.bf16.msra.mxu0 %v2314
      %2336 = vmatprep.subr.bf16.mxu0 0
      %2337 = vmatpush1.bf16.msra.mxu0 %v2315
      %2338 = vmatprep.subr.bf16.mxu0 0
      %2339 = vmatpush1.bf16.msra.mxu0 %v2316
      %2340 = vmatprep.subr.bf16.mxu0 0
      %2341 = vmatpush1.bf16.msra.mxu0 %v2317
      %2342 = vmatprep.subr.bf16.mxu0 0
      %2343 = vmatpush1.bf16.msra.mxu0 0
      %2344 = vmatprep.subr.bf16.mxu0 0
      %2345 = vmatpush1.bf16.msra.mxu0 0
      %2346 = vmatprep.subr.bf16.mxu0 0
      %2347 = vmatpush1.bf16.msra.mxu0 0
      %2348 = vmatprep.subr.bf16.mxu0 0
      %2349 = vmatpush1.bf16.msra.mxu0 0
      %2350 = vmatprep.subr.bf16.mxu0 0
      %2351 = vmatpush1.bf16.msra.mxu0 0
      %2352 = vmatprep.subr.bf16.mxu0 0
      %2353 = vmatpush1.bf16.msra.mxu0 0
      %2354 = vmatprep.subr.bf16.mxu0 0
      %2355 = vmatpush1.bf16.msra.mxu0 0
      %2356 = vmatprep.subr.bf16.mxu0 0
      %2357 = vmatpush1.bf16.msra.mxu0 0
      %2358 = vmatprep.mubr.bf16.mxu0 0
      %2359 = vmatmul.mubr.bf16.gmra.mrb[0].mxu0 %v2246
      %v2360 = vpop.f32.mrb[0].mxu0
      %v2361 = vadd.f32 0.0, %v2360
      %v2362 = vpop.f32.mrb[0].mxu0
      %v2363 = vpop.f32.mrb[0].mxu0
      %v2364 = vadd.f32 0.0, %v2363
      %v2365 = vpop.f32.mrb[0].mxu0
      %2366 = vmatprep.mubr.bf16.mxu0 0
      %2367 = vmatmul.mubr.bf16.gmra.mrb[0].mxu0 %v2247
      %v2368 = vpop.f32.mrb[0].mxu0
      %v2369 = vadd.f32 0.0, %v2368
      %v2370 = vpop.f32.mrb[0].mxu0
      %v2371 = vpop.f32.mrb[0].mxu0
      %v2372 = vadd.f32 0.0, %v2371
      %v2373 = vpop.f32.mrb[0].mxu0
      %2374 = vmatprep.mubr.bf16.mxu0 0
      %2375 = vmatmul.mubr.bf16.gmra.mrb[0].mxu0 %v2248
      %v2376 = vpop.f32.mrb[0].mxu0
      %v2377 = vadd.f32 0.0, %v2376
      %v2378 = vpop.f32.mrb[0].mxu0
      %v2379 = vpop.f32.mrb[0].mxu0
      %v2380 = vadd.f32 0.0, %v2379
      %v2381 = vpop.f32.mrb[0].mxu0
      %2382 = vmatprep.mubr.bf16.mxu0 0
      %2383 = vmatmul.mubr.bf16.gmra.mrb[0].mxu0 %v2249
      %v2384 = vpop.f32.mrb[0].mxu0
      %v2385 = vadd.f32 0.0, %v2384
      %v2386 = vpop.f32.mrb[0].mxu0
      %v2387 = vpop.f32.mrb[0].mxu0
      %v2388 = vadd.f32 0.0, %v2387
      %v2389 = vpop.f32.mrb[0].mxu0
      %2390 = vmatprep.mubr.bf16.mxu0 0
      %2391 = vmatmul.mubr.bf16.gmra.mrb[0].mxu0 %v2250
      %v2392 = vpop.f32.mrb[0].mxu0
      %v2393 = vadd.f32 0.0, %v2392
      %v2394 = vpop.f32.mrb[0].mxu0
      %v2395 = vpop.f32.mrb[0].mxu0
      %v2396 = vadd.f32 0.0, %v2395
      %v2397 = vpop.f32.mrb[0].mxu0
      %2398 = vmatprep.mubr.bf16.mxu0 0
      %2399 = vmatmul.mubr.bf16.gmra.mrb[0].mxu0 %v2251
      %v2400 = vpop.f32.mrb[0].mxu0
      %v2401 = vadd.f32 0.0, %v2400
      %v2402 = vpop.f32.mrb[0].mxu0
      %v2403 = vpop.f32.mrb[0].mxu0
      %v2404 = vadd.f32 0.0, %v2403
      %v2405 = vpop.f32.mrb[0].mxu0
      %2406 = vmatprep.mubr.bf16.mxu0 0
      %2407 = vmatmul.mubr.bf16.gmra.mrb[0].mxu0 %v2252
      %v2408 = vpop.f32.mrb[0].mxu0
      %v2409 = vadd.f32 0.0, %v2408
      %v2410 = vpop.f32.mrb[0].mxu0
      %v2411 = vpop.f32.mrb[0].mxu0
      %v2412 = vadd.f32 0.0, %v2411
      %v2413 = vpop.f32.mrb[0].mxu0
      %2414 = vmatprep.mubr.bf16.mxu0 0
      %2415 = vmatmul.mubr.bf16.gmra.mrb[0].mxu0 %v2253
      %v2416 = vpop.f32.mrb[0].mxu0
      %v2417 = vadd.f32 0.0, %v2416
      %v2418 = vpop.f32.mrb[0].mxu0
      %v2419 = vpop.f32.mrb[0].mxu0
      %v2420 = vadd.f32 0.0, %v2419
      %v2421 = vpop.f32.mrb[0].mxu0
      %2422 = vmatprep.mubr.bf16.mxu0 0
      %2423 = vmatmul.mubr.bf16.gmra.mrb[0].mxu0 %v2254
      %v2424 = vpop.f32.mrb[0].mxu0
      %v2425 = vadd.f32 0.0, %v2424
      %v2426 = vpop.f32.mrb[0].mxu0
      %v2427 = vpop.f32.mrb[0].mxu0
      %v2428 = vadd.f32 0.0, %v2427
      %v2429 = vpop.f32.mrb[0].mxu0
      %2430 = vmatprep.mubr.bf16.mxu0 0
      %2431 = vmatmul.mubr.bf16.gmra.mrb[0].mxu0 %v2255
      %v2432 = vpop.f32.mrb[0].mxu0
      %v2433 = vadd.f32 0.0, %v2432
      %v2434 = vpop.f32.mrb[0].mxu0
      %v2435 = vpop.f32.mrb[0].mxu0
      %v2436 = vadd.f32 0.0, %v2435
      %v2437 = vpop.f32.mrb[0].mxu0
      %2438 = vmatprep.mubr.bf16.mxu0 0
      %2439 = vmatmul.mubr.bf16.gmra.mrb[0].mxu0 %v2256
      %v2440 = vpop.f32.mrb[0].mxu0
      %v2441 = vadd.f32 0.0, %v2440
      %v2442 = vpop.f32.mrb[0].mxu0
      %v2443 = vpop.f32.mrb[0].mxu0
      %v2444 = vadd.f32 0.0, %v2443
      %v2445 = vpop.f32.mrb[0].mxu0
      %2446 = vmatprep.mubr.bf16.mxu0 0
      %2447 = vmatmul.mubr.bf16.gmra.mrb[0].mxu0 %v2257
      %v2448 = vpop.f32.mrb[0].mxu0
      %v2449 = vadd.f32 0.0, %v2448
      %v2450 = vpop.f32.mrb[0].mxu0
      %v2451 = vpop.f32.mrb[0].mxu0
      %v2452 = vadd.f32 0.0, %v2451
      %v2453 = vpop.f32.mrb[0].mxu0
      %2454 = vmatprep.mubr.bf16.mxu0 0
      %2455 = vmatmul.mubr.bf16.gmra.mrb[0].mxu0 %v2258
      %v2456 = vpop.f32.mrb[0].mxu0
      %v2457 = vadd.f32 0.0, %v2456
      %v2458 = vpop.f32.mrb[0].mxu0
      %v2459 = vpop.f32.mrb[0].mxu0
      %v2460 = vadd.f32 0.0, %v2459
      %v2461 = vpop.f32.mrb[0].mxu0
      %2462 = vmatprep.mubr.bf16.mxu0 0
      %2463 = vmatmul.mubr.bf16.gmra.mrb[0].mxu0 %v2259
      %v2464 = vpop.f32.mrb[0].mxu0
      %v2465 = vadd.f32 0.0, %v2464
      %v2466 = vpop.f32.mrb[0].mxu0
      %v2467 = vpop.f32.mrb[0].mxu0
      %v2468 = vadd.f32 0.0, %v2467
      %v2469 = vpop.f32.mrb[0].mxu0
      %2470 = vmatprep.mubr.bf16.mxu0 0
      %2471 = vmatmul.mubr.bf16.gmra.mrb[0].mxu0 %v2260
      %v2472 = vpop.f32.mrb[0].mxu0
      %v2473 = vadd.f32 0.0, %v2472
      %v2474 = vpop.f32.mrb[0].mxu0
      %v2475 = vpop.f32.mrb[0].mxu0
      %v2476 = vadd.f32 0.0, %v2475
      %v2477 = vpop.f32.mrb[0].mxu0
      %2478 = vmatprep.mubr.bf16.mxu0 0
      %2479 = vmatmul.mubr.bf16.gmra.mrb[0].mxu0 %v2261
      %v2480 = vpop.f32.mrb[0].mxu0
      %v2481 = vadd.f32 0.0, %v2480
      %v2482 = vpop.f32.mrb[0].mxu0
      %v2483 = vpop.f32.mrb[0].mxu0
      %v2484 = vadd.f32 0.0, %v2483
      %v2485 = vpop.f32.mrb[0].mxu0
      %2486 = vdwg.mxu0
      %v2488 = vlaneseq
      %v2489 = vshrl.u32 %v2488, 7
      %v2490 = vsub.s32 0, %v2489
      %v2491 = vrot.slane %v375, %v2490
      %v2493 = vmul.f32 %v2361, %v2491
      %v2494 = vmul.f32 %v2364, %v2491
      %v2495 = vmul.f32 %v2369, %v2491
      %v2496 = vmul.f32 %v2372, %v2491
      %v2497 = vmul.f32 %v2377, %v2491
      %v2498 = vmul.f32 %v2380, %v2491
      %v2499 = vmul.f32 %v2385, %v2491
      %v2500 = vmul.f32 %v2388, %v2491
      %v2501 = vmul.f32 %v2393, %v2491
      %v2502 = vmul.f32 %v2396, %v2491
      %v2503 = vmul.f32 %v2401, %v2491
      %v2504 = vmul.f32 %v2404, %v2491
      %v2505 = vmul.f32 %v2409, %v2491
      %v2506 = vmul.f32 %v2412, %v2491
      %v2507 = vmul.f32 %v2417, %v2491
      %v2508 = vmul.f32 %v2420, %v2491
      %v2509 = vmul.f32 %v2425, %v2491
      %v2510 = vmul.f32 %v2428, %v2491
      %v2511 = vmul.f32 %v2433, %v2491
      %v2512 = vmul.f32 %v2436, %v2491
      %v2513 = vmul.f32 %v2441, %v2491
      %v2514 = vmul.f32 %v2444, %v2491
      %v2515 = vmul.f32 %v2449, %v2491
      %v2516 = vmul.f32 %v2452, %v2491
      %v2517 = vmul.f32 %v2457, %v2491
      %v2518 = vmul.f32 %v2460, %v2491
      %v2519 = vmul.f32 %v2465, %v2491
      %v2520 = vmul.f32 %v2468, %v2491
      %v2521 = vmul.f32 %v2473, %v2491
      %v2522 = vmul.f32 %v2476, %v2491
      %v2523 = vmul.f32 %v2481, %v2491
      %v2524 = vmul.f32 %v2484, %v2491
      %v2526 = vlaneseq
      %v2527 = vshrl.u32 %v2526, 7
      %v2528 = vsub.s32 0, %v2527
      %v2529 = vrot.slane %v376, %v2528
      %v2531 = vadd.f32 %v2493, %v2529
      %v2532 = vadd.f32 %v2494, %v2529
      %v2533 = vadd.f32 %v2495, %v2529
      %v2534 = vadd.f32 %v2496, %v2529
      %v2535 = vadd.f32 %v2497, %v2529
      %v2536 = vadd.f32 %v2498, %v2529
      %v2537 = vadd.f32 %v2499, %v2529
      %v2538 = vadd.f32 %v2500, %v2529
      %v2539 = vadd.f32 %v2501, %v2529
      %v2540 = vadd.f32 %v2502, %v2529
      %v2541 = vadd.f32 %v2503, %v2529
      %v2542 = vadd.f32 %v2504, %v2529
      %v2543 = vadd.f32 %v2505, %v2529
      %v2544 = vadd.f32 %v2506, %v2529
      %v2545 = vadd.f32 %v2507, %v2529
      %v2546 = vadd.f32 %v2508, %v2529
      %v2547 = vadd.f32 %v2509, %v2529
      %v2548 = vadd.f32 %v2510, %v2529
      %v2549 = vadd.f32 %v2511, %v2529
      %v2550 = vadd.f32 %v2512, %v2529
      %v2551 = vadd.f32 %v2513, %v2529
      %v2552 = vadd.f32 %v2514, %v2529
      %v2553 = vadd.f32 %v2515, %v2529
      %v2554 = vadd.f32 %v2516, %v2529
      %v2555 = vadd.f32 %v2517, %v2529
      %v2556 = vadd.f32 %v2518, %v2529
      %v2557 = vadd.f32 %v2519, %v2529
      %v2558 = vadd.f32 %v2520, %v2529
      %v2559 = vadd.f32 %v2521, %v2529
      %v2560 = vadd.f32 %v2522, %v2529
      %v2561 = vadd.f32 %v2523, %v2529
      %v2562 = vadd.f32 %v2524, %v2529
      %v2563 = vadd.f32 %v2531, %v334
      %v2564 = vadd.f32 %v2532, %v335
      %v2565 = vadd.f32 %v2533, %v336
      %v2566 = vadd.f32 %v2534, %v337
      %v2567 = vadd.f32 %v2535, %v338
      %v2568 = vadd.f32 %v2536, %v339
      %v2569 = vadd.f32 %v2537, %v340
      %v2570 = vadd.f32 %v2538, %v341
      %v2571 = vadd.f32 %v2539, %v342
      %v2572 = vadd.f32 %v2540, %v343
      %v2573 = vadd.f32 %v2541, %v344
      %v2574 = vadd.f32 %v2542, %v345
      %v2575 = vadd.f32 %v2543, %v346
      %v2576 = vadd.f32 %v2544, %v347
      %v2577 = vadd.f32 %v2545, %v348
      %v2578 = vadd.f32 %v2546, %v349
      %v2579 = vadd.f32 %v2547, %v350
      %v2580 = vadd.f32 %v2548, %v351
      %v2581 = vadd.f32 %v2549, %v352
      %v2582 = vadd.f32 %v2550, %v353
      %v2583 = vadd.f32 %v2551, %v354
      %v2584 = vadd.f32 %v2552, %v355
      %v2585 = vadd.f32 %v2553, %v356
      %v2586 = vadd.f32 %v2554, %v357
      %v2587 = vadd.f32 %v2555, %v358
      %v2588 = vadd.f32 %v2556, %v359
      %v2589 = vadd.f32 %v2557, %v360
      %v2590 = vadd.f32 %v2558, %v361
      %v2591 = vadd.f32 %v2559, %v362
      %v2592 = vadd.f32 %v2560, %v363
      %v2593 = vadd.f32 %v2561, %v364
      %v2594 = vadd.f32 %v2562, %v365
      %v2595 = vmax.f32 %v2563, 0.0
      %v2596 = vmax.f32 %v2564, 0.0
      %v2597 = vmax.f32 %v2565, 0.0
      %v2598 = vmax.f32 %v2566, 0.0
      %v2599 = vmax.f32 %v2567, 0.0
      %v2600 = vmax.f32 %v2568, 0.0
      %v2601 = vmax.f32 %v2569, 0.0
      %v2602 = vmax.f32 %v2570, 0.0
      %v2603 = vmax.f32 %v2571, 0.0
      %v2604 = vmax.f32 %v2572, 0.0
      %v2605 = vmax.f32 %v2573, 0.0
      %v2606 = vmax.f32 %v2574, 0.0
      %v2607 = vmax.f32 %v2575, 0.0
      %v2608 = vmax.f32 %v2576, 0.0
      %v2609 = vmax.f32 %v2577, 0.0
      %v2610 = vmax.f32 %v2578, 0.0
      %v2611 = vmax.f32 %v2579, 0.0
      %v2612 = vmax.f32 %v2580, 0.0
      %v2613 = vmax.f32 %v2581, 0.0
      %v2614 = vmax.f32 %v2582, 0.0
      %v2615 = vmax.f32 %v2583, 0.0
      %v2616 = vmax.f32 %v2584, 0.0
      %v2617 = vmax.f32 %v2585, 0.0
      %v2618 = vmax.f32 %v2586, 0.0
      %v2619 = vmax.f32 %v2587, 0.0
      %v2620 = vmax.f32 %v2588, 0.0
      %v2621 = vmax.f32 %v2589, 0.0
      %v2622 = vmax.f32 %v2590, 0.0
      %v2623 = vmax.f32 %v2591, 0.0
      %v2624 = vmax.f32 %v2592, 0.0
      %v2625 = vmax.f32 %v2593, 0.0
      %v2626 = vmax.f32 %v2594, 0.0
      %2627 = vst [vmem:[%s332] sm:$0xff] %v2595
      %2628 = vst [vmem:[%s332 + $0x8] sm:$0xff] %v2596
      %2629 = vst [vmem:[%s332 + $0x10] sm:$0xff] %v2597
      %2630 = vst [vmem:[%s332 + $0x18] sm:$0xff] %v2598
      %2631 = vst [vmem:[%s332 + $0x20] sm:$0xff] %v2599
      %2632 = vst [vmem:[%s332 + $0x28] sm:$0xff] %v2600
      %2633 = vst [vmem:[%s332 + $0x30] sm:$0xff] %v2601
      %2634 = vst [vmem:[%s332 + $0x38] sm:$0xff] %v2602
      %2635 = vst [vmem:[%s332 + $0x40] sm:$0xff] %v2603
      %2636 = vst [vmem:[%s332 + $0x48] sm:$0xff] %v2604
      %2637 = vst [vmem:[%s332 + $0x50] sm:$0xff] %v2605
      %2638 = vst [vmem:[%s332 + $0x58] sm:$0xff] %v2606
      %2639 = vst [vmem:[%s332 + $0x60] sm:$0xff] %v2607
      %2640 = vst [vmem:[%s332 + $0x68] sm:$0xff] %v2608
      %2641 = vst [vmem:[%s332 + $0x70] sm:$0xff] %v2609
      %2642 = vst [vmem:[%s332 + $0x78] sm:$0xff] %v2610
      %2643 = vst [vmem:[%s332 + $0x80] sm:$0xff] %v2611
      %2644 = vst [vmem:[%s332 + $0x88] sm:$0xff] %v2612
      %2645 = vst [vmem:[%s332 + $0x90] sm:$0xff] %v2613
      %2646 = vst [vmem:[%s332 + $0x98] sm:$0xff] %v2614
      %2647 = vst [vmem:[%s332 + $0xa0] sm:$0xff] %v2615
      %2648 = vst [vmem:[%s332 + $0xa8] sm:$0xff] %v2616
      %2649 = vst [vmem:[%s332 + $0xb0] sm:$0xff] %v2617
      %2650 = vst [vmem:[%s332 + $0xb8] sm:$0xff] %v2618
      %2651 = vst [vmem:[%s332 + $0xc0] sm:$0xff] %v2619
      %2652 = vst [vmem:[%s332 + $0xc8] sm:$0xff] %v2620
      %2653 = vst [vmem:[%s332 + $0xd0] sm:$0xff] %v2621
      %2654 = vst [vmem:[%s332 + $0xd8] sm:$0xff] %v2622
      %2655 = vst [vmem:[%s332 + $0xe0] sm:$0xff] %v2623
      %2656 = vst [vmem:[%s332 + $0xe8] sm:$0xff] %v2624
      %2657 = vst [vmem:[%s332 + $0xf0] sm:$0xff] %v2625
      %2658 = vst [vmem:[%s332 + $0xf8] sm:$0xff] %v2626
      %p2659 = scmp.lt.s32.totalorder %s20, 1
      %s2660 = scalar_select %p2659, %s20, 1
      %s2661 = smul.addr %s2660, 32
      %s2662 = smul.addr %s2661, 8
      %s2663 = scalar_lea.vmem %s9, %s2662
      // Predicated region
      $region57: #{basic_block_pallas.1} parent=55 // pred_check
        %p2664 = pneg %p232
      $region58: #{basic_block_pallas.1} parent=55 // pred_check_branch
        %2666 = sbr.rel (%p2664) target = $region60
      $region59: #{basic_block_pallas.1} parent=55 // pred_region
        _
      $region60: #{basic_block_pallas.1} parent=55 // pred_fallthru
        _
    $region56: #{basic_block_pallas.1} parent=5 // pred_fallthru
      _
    %p2667 = scmp.le.s32.totalorder 2, %s15
    // Predicated region
    $region61: #{basic_block_pallas.1} parent=5 // pred_check
      %p2668 = pneg %p2667
    $region62: #{basic_block_pallas.1} parent=5 // pred_check_branch
      %2670 = sbr.rel (%p2668) target = $region64
    $region63: #{basic_block_pallas.1} parent=5 // pred_region
      %s2671 = ssub.s32 %s15, 2
      // Predicated region
      $region65: #{basic_block_pallas.1} parent=63 // pred_check
        %p2672 = pneg %p238
      $region66: #{basic_block_pallas.1} parent=63 // pred_check_branch
        %2674 = sbr.rel (%p2672) target = $region68
      $region67: #{basic_block_pallas.1} parent=63 // pred_region
        %p2675 = scmp.lt.s32.totalorder %s21, 1
        %s2676 = scalar_select %p2675, %s21, 1
        %s2677 = smul.addr %s2676, 32
        %s2678 = smul.addr %s2677, 8
        %s2679 = scalar_lea.vmem %s9, %s2678
      $region68: #{basic_block_pallas.1} parent=63 // pred_fallthru
        _
    $region64: #{basic_block_pallas.1} parent=5 // pred_fallthru
      _
  $region6: #{basic_block_pallas.1} parent=0 // loop_footer
    %s19 = sadd.s32 1, %s15
  $region7: #{basic_block_pallas.1} parent=0 // loop_footer_branch
    %14 = sbr.rel target = $region3
  $region8: #{basic_block_pallas.1} parent=0 // loop_exit
    _

</llo_original>
